<compile_context>
chip_gen: v6e
topology: v6e:2x2x1
jax: 0.10.0
libtpu: 0.0.40
codegen_flags: <defaults>
</compile_context>

<pallas_src>
import functools

import jax
import jax.numpy as jnp
from jax import lax
from jax.experimental import pallas as pl
from jax.experimental.pallas import tpu as pltpu

MAT_DIFF_LOSS_SCALE = 0.001
_LANES = 128


def _round_up(x, m):
    return ((x + m - 1) // m) * m


def _get_loss_kernel(pred_ref, tgt_ref, trans_ref, out_ref,
                     acc_nll_ref, acc_fro_ref, *, true_b, scale):
    i = pl.program_id(0)          # batch-tile ("arbitrary" reduction) index
    nt = pl.num_programs(0)

    @pl.when(i == 0)
    def _init():
        acc_nll_ref[...] = jnp.zeros_like(acc_nll_ref)
        acc_fro_ref[...] = jnp.zeros_like(acc_fro_ref)

    # Native-dtype loads over the DMA; promote only for element-wise f32 math.
    pred = pred_ref[...].astype(jnp.float32)     # (TB, C)
    tgt = tgt_ref[...]                           # (TB, 1) int32
    t = trans_ref[...]                           # (TB, d, d) native dtype (bf16 ok)

    tb, ncls = pred.shape
    d = t.shape[-1]

    # valid-row mask: rows >= true_b belong to the (unspecified) partial last block
    rows = i * tb + lax.broadcasted_iota(jnp.int32, (tb, 1), 0)
    valid = rows < true_b                        # (TB, 1) bool

    # ---- NLL partial: accumulate pred[r, target[r]] contributions lane-dense ----
    # TODO(synk): PyTorch F.nll_loss ignore_index=-100 / class weights not handled;
    #             targets are assumed to all be valid class indices.
    col = lax.broadcasted_iota(jnp.int32, (tb, ncls), 1)
    onehot = (col == tgt).astype(jnp.float32)                       # (TB, C)
    acc_nll_ref[...] += jnp.where(valid, pred * onehot, 0.0)        # (TB, C)

    # ---- regularizer partial: ||T Tᵀ − I||_F via explicit (G − I) residual ----
    # Batched matmul in the operands' native dtype -> MXU, f32 accumulation.
    gram = lax.dot_general(t, t, (((2,), (2,)), ((0,), (0,))),
                           preferred_element_type=jnp.float32)      # (TB, d, d)
    ri = lax.broadcasted_iota(jnp.int32, (d, d), 0)
    ci = lax.broadcasted_iota(jnp.int32, (d, d), 1)
    eye = (ri == ci).astype(jnp.float32)                            # (d, d)
    resid = gram - eye[None, :, :]                                  # G - I
    frosq = jnp.sum(jnp.sum(resid * resid, axis=2), axis=1,
                    keepdims=True)                                  # (TB, 1), >= 0
    acc_fro_ref[...] += jnp.where(valid, jnp.sqrt(frosq), 0.0)      # (TB, 1)

    @pl.when(i == nt - 1)
    def _finalize():
        picked_sum = jnp.sum(acc_nll_ref[...])    # Σ pred[r, target[r]]
        reg_sum = jnp.sum(acc_fro_ref[...])       # Σ_b ||T_b T_bᵀ − I||_F
        total = (-picked_sum + jnp.float32(scale) * reg_sum) / jnp.float32(true_b)
        # lane-dense unmasked store of the final scalar
        out_ref[...] = jnp.full(out_ref.shape, total, jnp.float32)


def get_loss(pred, target, trans_feat, *,
             mat_diff_loss_scale=MAT_DIFF_LOSS_SCALE, tile_b=256):
    """pred: (B, C) log-probs, target: (B,) int, trans_feat: (B, d, d)."""
    B, C = pred.shape
    d = trans_feat.shape[-1]

    tb = min(tile_b, _round_up(B, 8))            # sublane-aligned batch tile
    nt = pl.cdiv(B, tb)                          # partial last block handled in-kernel

    target2d = target.astype(jnp.int32).reshape(B, 1)   # tiny; no big-input padding

    kernel = functools.partial(_get_loss_kernel, true_b=B,
                               scale=float(mat_diff_loss_scale))

    out = pl.pallas_call(
        kernel,
        out_shape=jax.ShapeDtypeStruct((1, _LANES), jnp.float32),
        grid_spec=pltpu.PrefetchScalarGridSpec(
            num_scalar_prefetch=0,
            grid=(nt,),
            in_specs=[
                pl.BlockSpec((tb, C), lambda i: (i, 0)),
                pl.BlockSpec((tb, 1), lambda i: (i, 0)),
                pl.BlockSpec((tb, d, d), lambda i: (i, 0, 0)),
            ],
            out_specs=pl.BlockSpec((1, _LANES), lambda i: (0, 0)),
            scratch_shapes=[
                pltpu.VMEM((tb, C), jnp.float32),   # Σ pred[r, target[r]] contributions
                pltpu.VMEM((tb, 1), jnp.float32),   # Σ per-row Frobenius norms
            ],
        ),
        compiler_params=pltpu.CompilerParams(
            dimension_semantics=("arbitrary",),
            vmem_limit_bytes=48 * 1024 * 1024,   # ~25% under v7x's 64 MiB physical
        ),
    )(pred, target2d, trans_feat)

    return out[0, 0]


if __name__ == "__main__":
    key = jax.random.PRNGKey(0)
    k1, k2, k3 = jax.random.split(key, 3)

    # small shapes; B=10 deliberately not a sublane multiple to exercise the
    # partial-last-block + valid-row-masking path (no wrapper pad anymore)
    B, C, D = 10, 16, 32
    logits = jax.random.normal(k1, (B, C), dtype=jnp.float32)
    pred = jax.nn.log_softmax(logits, axis=-1)                 # like F.log_softmax
    target = jax.random.randint(k2, (B,), 0, C, dtype=jnp.int32)
    trans_feat = jax.random.normal(k3, (B, D, D), dtype=jnp.float32) * 0.1

    total_loss = jax.block_until_ready(get_loss(pred, target, trans_feat))

    # pure-JAX reference (matches the PyTorch module)
    nll_ref = -jnp.mean(pred[jnp.arange(B), target])
    gram = jnp.einsum('bij,bkj->bik', trans_feat, trans_feat) - jnp.eye(D)[None]
    reg_ref = jnp.mean(jnp.sqrt(jnp.sum(gram * gram, axis=(1, 2))))
    ref = nll_ref + reg_ref * MAT_DIFF_LOSS_SCALE
    assert jnp.allclose(total_loss, ref, rtol=1e-5, atol=1e-5), (total_loss, ref)

    print("KERNEL_OK")
</pallas_src>

<mosaic_0001>
module attributes {stable_mosaic.version = 11 : i64} {
  func.func @_get_loss_kernel(%arg0: i32, %arg1: memref<16x16xf32, #tpu.memory_space<vmem>>, %arg2: memref<16x1xi32, #tpu.memory_space<vmem>>, %arg3: memref<16x32x32xf32, #tpu.memory_space<vmem>>, %arg4: memref<1x128xf32, #tpu.memory_space<vmem>>, %arg5: memref<16x16xf32, #tpu.memory_space<vmem>>, %arg6: memref<16x1xf32, #tpu.memory_space<vmem>>) attributes {dimension_semantics = [#tpu.dimension_semantics<arbitrary>], iteration_bounds = array<i64: 1>, scalar_prefetch = 0 : i64, scratch_operands = 2 : i64, tpu.core_type = #tpu.core_type<tc>, window_params = [{transform_indices = @transform_0, window_bounds = array<i64: 16, 16>}, {transform_indices = @transform_1, window_bounds = array<i64: 16, 1>}, {transform_indices = @transform_2, window_bounds = array<i64: 16, 32, 32>}, {pipeline_mode = #tpu.pipeline_mode<synchronous>, transform_indices = @transform_3, window_bounds = array<i64: 1, 128>}]} {
    %c0_i32 = arith.constant 0 : i32
    %0 = arith.cmpi eq, %arg0, %c0_i32 : i32
    %1 = arith.extui %0 : i1 to i32
    %c0_i32_0 = arith.constant 0 : i32
    %2 = arith.cmpi ne, %1, %c0_i32_0 : i32
    scf.if %2 {
      %cst_21 = arith.constant 0.000000e+00 : f32
      %47 = vector.broadcast %cst_21 : f32 to vector<16x16xf32>
      %c0_22 = arith.constant 0 : index
      %c0_23 = arith.constant 0 : index
      %48 = vector.load %arg5[%c0_22, %c0_23] : memref<16x16xf32, #tpu.memory_space<vmem>>, vector<16x16xf32>
      tpu.vector_store %arg5[%c0_22, %c0_23], %47 {strides = array<i32>} : memref<16x16xf32, #tpu.memory_space<vmem>>, vector<16x16xf32>,
      %cst_24 = arith.constant 0.000000e+00 : f32
      %49 = vector.broadcast %cst_24 : f32 to vector<16x1xf32>
      %c0_25 = arith.constant 0 : index
      %c0_26 = arith.constant 0 : index
      %50 = vector.load %arg6[%c0_25, %c0_26] : memref<16x1xf32, #tpu.memory_space<vmem>>, vector<16x1xf32>
      tpu.vector_store %arg6[%c0_25, %c0_26], %49 {strides = array<i32>} : memref<16x1xf32, #tpu.memory_space<vmem>>, vector<16x1xf32>,
    } else {
    }
    %c0 = arith.constant 0 : index
    %c0_1 = arith.constant 0 : index
    %3 = vector.load %arg1[%c0, %c0_1] : memref<16x16xf32, #tpu.memory_space<vmem>>, vector<16x16xf32>
    %c0_2 = arith.constant 0 : index
    %c0_3 = arith.constant 0 : index
    %4 = vector.load %arg2[%c0_2, %c0_3] : memref<16x1xi32, #tpu.memory_space<vmem>>, vector<16x1xi32>
    %c0_4 = arith.constant 0 : index
    %c0_5 = arith.constant 0 : index
    %c0_6 = arith.constant 0 : index
    %5 = vector.load %arg3[%c0_4, %c0_5, %c0_6] : memref<16x32x32xf32, #tpu.memory_space<vmem>>, vector<16x32x32xf32>
    %c16_i32 = arith.constant 16 : i32
    %6 = arith.muli %arg0, %c16_i32 : i32
    %7 = tpu.iota {dimensions = array<i32: 0>} : vector<16x1xi32>
    %8 = vector.broadcast %6 : i32 to vector<16x1xi32>
    %9 = arith.addi %8, %7 : vector<16x1xi32>
    %c10_i32 = arith.constant 10 : i32
    %10 = vector.broadcast %c10_i32 : i32 to vector<16x1xi32>
    %11 = arith.cmpi slt, %9, %10 : vector<16x1xi32>
    %12 = tpu.iota {dimensions = array<i32: 1>} : vector<16x16xi32>
    %13 = vector.broadcast %4 : vector<16x1xi32> to vector<16x16xi32>
    %14 = arith.cmpi eq, %12, %13 : vector<16x16xi32>
    %15 = arith.extui %14 : vector<16x16xi1> to vector<16x16xi32>
    %16 = arith.sitofp %15 : vector<16x16xi32> to vector<16x16xf32>
    %c0_7 = arith.constant 0 : index
    %c0_8 = arith.constant 0 : index
    %17 = vector.load %arg5[%c0_7, %c0_8] : memref<16x16xf32, #tpu.memory_space<vmem>>, vector<16x16xf32>
    %18 = arith.mulf %3, %16 : vector<16x16xf32>
    %cst = arith.constant 0.000000e+00 : f32
    %19 = vector.shape_cast %11 : vector<16x1xi1> to vector<16x1xi1>
    %20 = vector.broadcast %19 : vector<16x1xi1> to vector<16x16xi1>
    %21 = vector.broadcast %cst : f32 to vector<16x16xf32>
    %22 = arith.select %20, %18, %21 : vector<16x16xi1>, vector<16x16xf32>
    %23 = arith.addf %17, %22 : vector<16x16xf32>
    %c0_9 = arith.constant 0 : index
    %c0_10 = arith.constant 0 : index
    %24 = vector.load %arg5[%c0_9, %c0_10] : memref<16x16xf32, #tpu.memory_space<vmem>>, vector<16x16xf32>
    tpu.vector_store %arg5[%c0_9, %c0_10], %23 {strides = array<i32>} : memref<16x16xf32, #tpu.memory_space<vmem>>, vector<16x16xf32>,
    %cst_11 = arith.constant dense<0.000000e+00> : vector<16x32x32xf32>
    %25 = tpu.matmul %5, %5, %cst_11 {dimension_numbers = #tpu.dot_dimension_numbers<[2], [2], [1], [1], [0, 0, 0, 1, 1, 1], [0], [0]>} : vector<16x32x32xf32>, vector<16x32x32xf32>, vector<16x32x32xf32> -> vector<16x32x32xf32>
    %26 = tpu.iota {dimensions = array<i32: 0>} : vector<32x32xi32>
    %27 = tpu.iota {dimensions = array<i32: 1>} : vector<32x32xi32>
    %28 = arith.cmpi eq, %26, %27 : vector<32x32xi32>
    %29 = arith.extui %28 : vector<32x32xi1> to vector<32x32xi32>
    %30 = arith.sitofp %29 : vector<32x32xi32> to vector<32x32xf32>
    %31 = vector.shape_cast %30 : vector<32x32xf32> to vector<1x32x32xf32>
    %32 = vector.broadcast %31 : vector<1x32x32xf32> to vector<16x32x32xf32>
    %33 = arith.subf %25, %32 : vector<16x32x32xf32>
    %34 = arith.mulf %33, %33 : vector<16x32x32xf32>
    %cst_12 = arith.constant dense<0.000000e+00> : vector<16x32xf32>
    %35 = vector.multi_reduction <add>, %34, %cst_12 [2] : vector<16x32x32xf32> to vector<16x32xf32>
    %cst_13 = arith.constant dense<0.000000e+00> : vector<16xf32>
    %36 = vector.multi_reduction <add>, %35, %cst_13 [1] : vector<16x32xf32> to vector<16xf32>
    %37 = vector.shape_cast %36 : vector<16xf32> to vector<16x1xf32>
    %c0_14 = arith.constant 0 : index
    %c0_15 = arith.constant 0 : index
    %38 = vector.load %arg6[%c0_14, %c0_15] : memref<16x1xf32, #tpu.memory_space<vmem>>, vector<16x1xf32>
    %39 = math.sqrt %37 : vector<16x1xf32>
    %cst_16 = arith.constant 0.000000e+00 : f32
    %40 = vector.broadcast %cst_16 : f32 to vector<16x1xf32>
    %41 = arith.select %11, %39, %40 : vector<16x1xi1>, vector<16x1xf32>
    %42 = arith.addf %38, %41 : vector<16x1xf32>
    %c0_17 = arith.constant 0 : index
    %c0_18 = arith.constant 0 : index
    %43 = vector.load %arg6[%c0_17, %c0_18] : memref<16x1xf32, #tpu.memory_space<vmem>>, vector<16x1xf32>
    tpu.vector_store %arg6[%c0_17, %c0_18], %42 {strides = array<i32>} : memref<16x1xf32, #tpu.memory_space<vmem>>, vector<16x1xf32>,
    %c0_i32_19 = arith.constant 0 : i32
    %44 = arith.cmpi eq, %arg0, %c0_i32_19 : i32
    %45 = arith.extui %44 : i1 to i32
    %c0_i32_20 = arith.constant 0 : i32
    %46 = arith.cmpi ne, %45, %c0_i32_20 : i32
    scf.if %46 {
      %c0_21 = arith.constant 0 : index
      %c0_22 = arith.constant 0 : index
      %47 = vector.load %arg5[%c0_21, %c0_22] : memref<16x16xf32, #tpu.memory_space<vmem>>, vector<16x16xf32>
      %48 = vector.shape_cast %47 : vector<16x16xf32> to vector<1x16x16xf32>
      %cst_23 = arith.constant dense<0.000000e+00> : vector<1xf32>
      %49 = vector.multi_reduction <add>, %48, %cst_23 [1, 2] : vector<1x16x16xf32> to vector<1xf32>
      %50 = vector.shape_cast %49 : vector<1xf32> to vector<1x1x1xf32>
      %51 = vector.extract %50[0, 0, 0] : f32 from vector<1x1x1xf32>
      %c0_24 = arith.constant 0 : index
      %c0_25 = arith.constant 0 : index
      %52 = vector.load %arg6[%c0_24, %c0_25] : memref<16x1xf32, #tpu.memory_space<vmem>>, vector<16x1xf32>
      %53 = vector.shape_cast %52 : vector<16x1xf32> to vector<1x16x1xf32>
      %cst_26 = arith.constant dense<0.000000e+00> : vector<1xf32>
      %54 = vector.multi_reduction <add>, %53, %cst_26 [1, 2] : vector<1x16x1xf32> to vector<1xf32>
      %55 = vector.shape_cast %54 : vector<1xf32> to vector<1x1x1xf32>
      %56 = vector.extract %55[0, 0, 0] : f32 from vector<1x1x1xf32>
      %cst_27 = arith.constant 0.000000e+00 : f32
      %57 = arith.subf %cst_27, %51 : f32
      %cst_28 = arith.constant 1.000000e-03 : f32
      %58 = arith.mulf %cst_28, %56 : f32
      %59 = arith.addf %57, %58 : f32
      %cst_29 = arith.constant 1.000000e+01 : f32
      %60 = arith.divf %59, %cst_29 : f32
      %61 = vector.broadcast %60 : f32 to vector<1x128xf32>
      %c0_30 = arith.constant 0 : index
      %c0_31 = arith.constant 0 : index
      %62 = vector.load %arg4[%c0_30, %c0_31] : memref<1x128xf32, #tpu.memory_space<vmem>>, vector<1x128xf32>
      tpu.vector_store %arg4[%c0_30, %c0_31], %61 {strides = array<i32>} : memref<1x128xf32, #tpu.memory_space<vmem>>, vector<1x128xf32>,
    } else {
    }
    return
  }
  func.func @transform_0(%arg0: i32) -> (i32, i32) {
    %c0_i32 = arith.constant 0 : i32
    %c0_i32_0 = arith.constant 0 : i32
    return %arg0, %c0_i32 : i32, i32
  }
  func.func @transform_1(%arg0: i32) -> (i32, i32) {
    %c0_i32 = arith.constant 0 : i32
    %c0_i32_0 = arith.constant 0 : i32
    return %arg0, %c0_i32 : i32, i32
  }
  func.func @transform_2(%arg0: i32) -> (i32, i32, i32) {
    %c0_i32 = arith.constant 0 : i32
    %c0_i32_0 = arith.constant 0 : i32
    %c0_i32_1 = arith.constant 0 : i32
    return %arg0, %c0_i32, %c0_i32_0 : i32, i32, i32
  }
  func.func @transform_3(%arg0: i32) -> (i32, i32) {
    %c0_i32 = arith.constant 0 : i32
    %c0_i32_0 = arith.constant 0 : i32
    %c0_i32_1 = arith.constant 0 : i32
    return %c0_i32, %c0_i32_0 : i32, i32
  }
}

</mosaic_0001>

<llo_original>
// kernel: tpu_custom_call.1
$region0: #{tpu_custom_call.1}
  #allocation0 [shape = 'u32[]', space=smem, size = 0x4, offset = 0x4, fixed_abs, tag = 'smem constant byte address 0x4 - core index']
  #allocation1 [shape = 'u32[144,128]{1,0:T(1,128)}', space=vmem, size = 0x12000, scoped, tag = 'internal scratch']
  #allocation2 [shape = 'f32[16,16]{1,0:T(8,128)}', space=vmem, size = 0x2000, scoped, tag = 'scratch operand']
  #allocation3 [shape = 'f32[16,1]{1,0:T(8,128)}', space=vmem, size = 0x2000, scoped, tag = 'scratch operand']
  %s0 = inlined_call_operand.vmem [shape: f32[10,16], index: 0, kind: input, shape index: {}]
  %s1 = inlined_call_operand.vmem [shape: s32[10,1], index: 1, kind: input, shape index: {}]
  %s2 = inlined_call_operand.hbm [shape: f32[10,32,32], index: 2, kind: input, shape index: {}]
  %s3 = inlined_call_operand.hbm [shape: f32[1,128], index: 3, kind: output, shape index: {}]
  %s4 = sld [smem:[#allocation0]]
  $region34: #{tpu_custom_call.1} parent=0
    _
  %s6 = ssub.s32 1, %s4
  %s7 = scalar_select 0, %s6, %s4
  $region1: #{tpu_custom_call.1} parent=0
    #allocation4 [shape = 'u8[262144]{0}', space=vmem, size = 0x40000, scoped, tag = 'input window, operand 2, single buffered']
    #allocation5 [shape = 's32[1]{0}', space=sflag, size = 0x4, scoped, tag = 'scoped memory for tpu_custom_call.1']
    #allocation6 [shape = 's32[1]{0}', space=sflag, size = 0x4, scoped, tag = 'scoped memory for tpu_custom_call.1']
    #allocation7 [shape = 'u8[512]{0}', space=vmem, size = 0x400, scoped, tag = 'output window, operand 0, single buffered']
    %8 = vsyncpa [#allocation5], 0
    %9 = vsyncpa [#allocation6], 0
    // Predicated region
    $region2: #{tpu_custom_call.1} parent=1 // pred_check
      _
    $region3: #{tpu_custom_call.1} parent=1 // pred_check_branch
      %11 = sbr.rel (0) target = $region5
    $region4: #{tpu_custom_call.1} parent=1 // pred_region
      _
    $region5: #{tpu_custom_call.1} parent=1 // pred_fallthru
      _
    // Predicated region
    $region6: #{tpu_custom_call.1} parent=1 // pred_check
      _
    $region7: #{tpu_custom_call.1} parent=1 // pred_check_branch
      %13 = sbr.rel (0) target = $region9
    $region8: #{tpu_custom_call.1} parent=1 // pred_region
      _
    $region9: #{tpu_custom_call.1} parent=1 // pred_fallthru
      _
    // Predicated region
    $region10: #{tpu_custom_call.1} parent=1 // pred_check
      _
    $region11: #{tpu_custom_call.1} parent=1 // pred_check_branch
      %15 = sbr.rel (0) target = $region13
    $region12: #{tpu_custom_call.1} parent=1 // pred_region
      %s17 = ssub.s32 8192, 5120
      %18 = vsyncadd [#allocation5], %s17
      %s19 = sshll.u32 [#allocation4], 4
      %s20 = int_to_ptr.vmem [resolvable:$true] %s19
      %25 = dma.hbm_to_vmem [thread:$0]  %s2, 5120, %s20, [#allocation5], 128, 128, 8
    $region13: #{tpu_custom_call.1} parent=1 // pred_fallthru
      _
    // Predicated region
    $region14: #{tpu_custom_call.1} parent=1 // pred_check
      _
    $region15: #{tpu_custom_call.1} parent=1 // pred_check_branch
      %27 = sbr.rel (0) target = $region17
    $region16: #{tpu_custom_call.1} parent=1 // pred_region
      %28 = dma.done [#allocation5], 8192
    $region17: #{tpu_custom_call.1} parent=1 // pred_fallthru
      _
    %p29 = scmp.eq.s32.totalorder 0, 0
    // Predicated region
    $region18: #{tpu_custom_call.1} parent=1 // pred_check
      %p30 = pneg %p29
    $region19: #{tpu_custom_call.1} parent=1 // pred_check_branch
      %32 = sbr.rel (%p30) target = $region21
    $region20: #{tpu_custom_call.1} parent=1 // pred_region
      %vm33 = vcmask 130048
      %34 = vst.msk [vmem:[#allocation2] sm:$0xff] %vm33, 0.0
      %35 = vst.msk [vmem:[#allocation2 + $0x8] sm:$0xff] %vm33, 0.0
      %vm36 = vcmask 7168
      %37 = vst.msk [vmem:[#allocation3] sm:$0xff] %vm36, 0.0
      %38 = vst.msk [vmem:[#allocation3 + $0x8] sm:$0xff] %vm36, 0.0
    $region21: #{tpu_custom_call.1} parent=1 // pred_fallthru
      _
    %v39 = vld [vmem:[%s0] sm:$0xff]
    %v40 = vld [vmem:[%s0 + $0x8] sm:$0xff]
    %v41 = vld [vmem:[%s1] sm:$0xff]
    %v42 = vld [vmem:[%s1 + $0x8] sm:$0xff]
    %v43 = vld [vmem:[#allocation4] sm:$0xff]
    %v44 = vld [vmem:[#allocation4 + $0x8] sm:$0xff]
    %v45 = vld [vmem:[#allocation4 + $0x10] sm:$0xff]
    %v46 = vld [vmem:[#allocation4 + $0x18] sm:$0xff]
    %v47 = vld [vmem:[#allocation4 + $0x20] sm:$0xff]
    %v48 = vld [vmem:[#allocation4 + $0x28] sm:$0xff]
    %v49 = vld [vmem:[#allocation4 + $0x30] sm:$0xff]
    %v50 = vld [vmem:[#allocation4 + $0x38] sm:$0xff]
    %v51 = vld [vmem:[#allocation4 + $0x40] sm:$0xff]
    %v52 = vld [vmem:[#allocation4 + $0x48] sm:$0xff]
    %v53 = vld [vmem:[#allocation4 + $0x50] sm:$0xff]
    %v54 = vld [vmem:[#allocation4 + $0x58] sm:$0xff]
    %v55 = vld [vmem:[#allocation4 + $0x60] sm:$0xff]
    %v56 = vld [vmem:[#allocation4 + $0x68] sm:$0xff]
    %v57 = vld [vmem:[#allocation4 + $0x70] sm:$0xff]
    %v58 = vld [vmem:[#allocation4 + $0x78] sm:$0xff]
    %v59 = vld [vmem:[#allocation4 + $0x80] sm:$0xff]
    %v60 = vld [vmem:[#allocation4 + $0x88] sm:$0xff]
    %v61 = vld [vmem:[#allocation4 + $0x90] sm:$0xff]
    %v62 = vld [vmem:[#allocation4 + $0x98] sm:$0xff]
    %v63 = vld [vmem:[#allocation4 + $0xa0] sm:$0xff]
    %v64 = vld [vmem:[#allocation4 + $0xa8] sm:$0xff]
    %v65 = vld [vmem:[#allocation4 + $0xb0] sm:$0xff]
    %v66 = vld [vmem:[#allocation4 + $0xb8] sm:$0xff]
    %v67 = vld [vmem:[#allocation4 + $0xc0] sm:$0xff]
    %v68 = vld [vmem:[#allocation4 + $0xc8] sm:$0xff]
    %v69 = vld [vmem:[#allocation4 + $0xd0] sm:$0xff]
    %v70 = vld [vmem:[#allocation4 + $0xd8] sm:$0xff]
    %v71 = vld [vmem:[#allocation4 + $0xe0] sm:$0xff]
    %v72 = vld [vmem:[#allocation4 + $0xe8] sm:$0xff]
    %v73 = vld [vmem:[#allocation4 + $0xf0] sm:$0xff]
    %v74 = vld [vmem:[#allocation4 + $0xf8] sm:$0xff]
    %v75 = vld [vmem:[#allocation4 + $0x100] sm:$0xff]
    %v76 = vld [vmem:[#allocation4 + $0x108] sm:$0xff]
    %v77 = vld [vmem:[#allocation4 + $0x110] sm:$0xff]
    %v78 = vld [vmem:[#allocation4 + $0x118] sm:$0xff]
    %v79 = vld [vmem:[#allocation4 + $0x120] sm:$0xff]
    %v80 = vld [vmem:[#allocation4 + $0x128] sm:$0xff]
    %v81 = vld [vmem:[#allocation4 + $0x130] sm:$0xff]
    %v82 = vld [vmem:[#allocation4 + $0x138] sm:$0xff]
    %v83 = vld [vmem:[#allocation4 + $0x140] sm:$0xff]
    %v84 = vld [vmem:[#allocation4 + $0x148] sm:$0xff]
    %v85 = vld [vmem:[#allocation4 + $0x150] sm:$0xff]
    %v86 = vld [vmem:[#allocation4 + $0x158] sm:$0xff]
    %v87 = vld [vmem:[#allocation4 + $0x160] sm:$0xff]
    %v88 = vld [vmem:[#allocation4 + $0x168] sm:$0xff]
    %v89 = vld [vmem:[#allocation4 + $0x170] sm:$0xff]
    %v90 = vld [vmem:[#allocation4 + $0x178] sm:$0xff]
    %v91 = vld [vmem:[#allocation4 + $0x180] sm:$0xff]
    %v92 = vld [vmem:[#allocation4 + $0x188] sm:$0xff]
    %v93 = vld [vmem:[#allocation4 + $0x190] sm:$0xff]
    %v94 = vld [vmem:[#allocation4 + $0x198] sm:$0xff]
    %v95 = vld [vmem:[#allocation4 + $0x1a0] sm:$0xff]
    %v96 = vld [vmem:[#allocation4 + $0x1a8] sm:$0xff]
    %v97 = vld [vmem:[#allocation4 + $0x1b0] sm:$0xff]
    %v98 = vld [vmem:[#allocation4 + $0x1b8] sm:$0xff]
    %v99 = vld [vmem:[#allocation4 + $0x1c0] sm:$0xff]
    %v100 = vld [vmem:[#allocation4 + $0x1c8] sm:$0xff]
    %v101 = vld [vmem:[#allocation4 + $0x1d0] sm:$0xff]
    %v102 = vld [vmem:[#allocation4 + $0x1d8] sm:$0xff]
    %v103 = vld [vmem:[#allocation4 + $0x1e0] sm:$0xff]
    %v104 = vld [vmem:[#allocation4 + $0x1e8] sm:$0xff]
    %v105 = vld [vmem:[#allocation4 + $0x1f0] sm:$0xff]
    %v106 = vld [vmem:[#allocation4 + $0x1f8] sm:$0xff]
    %s107 = smul.u32 0, 16
    %v108 = vlaneseq
    %v109 = vshrl.u32 %v108, 7
    %v110 = vadd.s32 %v109, 8
    %v111 = vstv %s107
    %v112 = vadd.s32 %v111, %v109
    %v113 = vadd.s32 %v111, %v110
    %vm114 = vcmp.lt.s32.totalorder %v112, 10
    %vm115 = vcmp.lt.s32.totalorder %v113, 10
    %v116 = vlaneseq
    %v117 = vand.u32 %v116, 127
    %118 = vset.pattern.permute.xlu0 0
    %119 = vperm.xlu0 %118, %v41
    %v120 = vpop.permute.xlu0 %119
    %121 = vset.pattern.permute.xlu0 0
    %122 = vperm.xlu0 %121, %v42
    %v123 = vpop.permute.xlu0 %122
    %vm124 = vcmp.eq.s32.totalorder %v117, %v120
    %vm125 = vcmp.eq.s32.totalorder %v117, %v123
    %v126 = vsel %vm124, 1, 0
    %v127 = vsel %vm125, 1, 0
    %v128 = vcvt.s32.f32 %v126
    %v129 = vcvt.s32.f32 %v127
    %v130 = vld [vmem:[#allocation2] sm:$0xff]
    %v131 = vld [vmem:[#allocation2 + $0x8] sm:$0xff]
    %v132 = vmul.f32 %v39, %v128
    %v133 = vmul.f32 %v40, %v129
    %v134 = vsel %vm114, 1, 0
    %v135 = vsel %vm115, 1, 0
    %vm136 = vcmp.eq.s32.totalorder %v134, 1
    %vm137 = vcmp.eq.s32.totalorder %v135, 1
    %v138 = vsel %vm136, %v132, 0.0
    %v139 = vsel %vm137, %v133, 0.0
    %v140 = vadd.f32 %v130, %v138
    %v141 = vadd.f32 %v131, %v139
    %vm142 = vcmask 130048
    %143 = vst.msk [vmem:[#allocation2] sm:$0xff] %vm142, %v140
    %144 = vst.msk [vmem:[#allocation2 + $0x8] sm:$0xff] %vm142, %v141
    %vm145 = vcmask 261120
    %v147 = vsel %vm145, %v43, 0
    %v150 = vsel %vm145, %v44, 0
    %v153 = vsel %vm145, %v45, 0
    %v156 = vsel %vm145, %v46, 0
    %158 = vmatprep.subr.mxu0 0.0
    %159 = vmatpush1.xpose.msra.mxu0 0.0
    %160 = vmatprep.subr.mxu0 0.0
    %161 = vmatpush1.xpose.msra.mxu0 0.0
    %162 = vmatprep.subr.mxu0 0.0
    %163 = vmatpush1.xpose.msra.mxu0 0.0
    %164 = vmatprep.subr.mxu0 0.0
    %165 = vmatpush1.xpose.msra.mxu0 0.0
    %166 = vmatprep.subr.mxu0 0.0
    %167 = vmatpush1.xpose.msra.mxu0 0.0
    %168 = vmatprep.subr.mxu0 0.0
    %169 = vmatpush1.xpose.msra.mxu0 0.0
    %170 = vmatprep.subr.mxu0 0.0
    %171 = vmatpush1.xpose.msra.mxu0 0.0
    %172 = vmatprep.subr.mxu0 0.0
    %173 = vmatpush1.xpose.msra.mxu0 0.0
    %174 = vmatprep.subr.mxu0 0.0
    %175 = vmatpush1.xpose.msra.mxu0 0.0
    %176 = vmatprep.subr.mxu0 0.0
    %177 = vmatpush1.xpose.msra.mxu0 0.0
    %178 = vmatprep.subr.mxu0 0.0
    %179 = vmatpush1.xpose.msra.mxu0 0.0
    %180 = vmatprep.subr.mxu0 0.0
    %181 = vmatpush1.xpose.msra.mxu0 0.0
    %182 = vmatprep.subr.mxu0 0.0
    %183 = vmatpush1.xpose.msra.mxu0 %v156
    %184 = vmatprep.subr.mxu0 0.0
    %185 = vmatpush1.xpose.msra.mxu0 %v153
    %186 = vmatprep.subr.mxu0 0.0
    %187 = vmatpush1.xpose.msra.mxu0 %v150
    %188 = vmatprep.subr.mxu0 0.0
    %189 = vmatpush1.xpose.msra.mxu0 %v147
    %190 = vmatprep.subr.mxu0 0.0
    %191 = vmatpush2.xpose.msra.mxu0 0.0
    %192 = vmatprep.subr.mxu0 0.0
    %193 = vmatpush2.xpose.msra.mxu0 0.0
    %194 = vmatprep.subr.mxu0 0.0
    %195 = vmatpush2.xpose.msra.mxu0 0.0
    %196 = vmatprep.subr.mxu0 0.0
    %197 = vmatpush2.xpose.msra.mxu0 0.0
    %198 = vmatprep.subr.mxu0 0.0
    %199 = vmatpush2.xpose.msra.mxu0 0.0
    %200 = vmatprep.subr.mxu0 0.0
    %201 = vmatpush2.xpose.msra.mxu0 0.0
    %202 = vmatprep.subr.mxu0 0.0
    %203 = vmatpush2.xpose.msra.mxu0 0.0
    %204 = vmatprep.subr.mxu0 0.0
    %205 = vmatpush2.xpose.msra.mxu0 0.0
    %206 = vmatprep.subr.mxu0 0.0
    %207 = vmatpush2.xpose.msra.mxu0 0.0
    %208 = vmatprep.subr.mxu0 0.0
    %209 = vmatpush2.xpose.msra.mxu0 0.0
    %210 = vmatprep.subr.mxu0 0.0
    %211 = vmatpush2.xpose.msra.mxu0 0.0
    %212 = vmatprep.subr.mxu0 0.0
    %213 = vmatpush2.xpose.msra.mxu0 0.0
    %214 = vmatprep.subr.mxu0 0.0
    %215 = vmatpush2.xpose.msra.mxu0 0.0
    %216 = vmatprep.subr.mxu0 0.0
    %217 = vmatpush2.xpose.msra.mxu0 0.0
    %218 = vmatprep.subr.mxu0 0.0
    %219 = vmatpush2.xpose.msra.mxu0 0.0
    %220 = vmatprep.subr.mxu0 0.0
    %221 = vmatpush2.xpose.msra.mxu0 0.0
    %222 = vmatprep.mubr.f32.mxu0 0.0
    %223 = vmatmul.mubr.f32.gmra.mxu0 %v147
    %v224 = vpop.f32.mrf.mxu0
    %v225 = vadd.f32 0.0, %v224
    %v226 = vpop.f32.mrf.mxu0
    %227 = vmatprep.mubr.f32.mxu0 0.0
    %228 = vmatmul.mubr.f32.gmra.mxu0 %v150
    %v229 = vpop.f32.mrf.mxu0
    %v230 = vadd.f32 0.0, %v229
    %v231 = vpop.f32.mrf.mxu0
    %232 = vmatprep.mubr.f32.mxu0 0.0
    %233 = vmatmul.mubr.f32.gmra.mxu0 %v153
    %v234 = vpop.f32.mrf.mxu0
    %v235 = vadd.f32 0.0, %v234
    %v236 = vpop.f32.mrf.mxu0
    %237 = vmatprep.mubr.f32.mxu0 0.0
    %238 = vmatmul.mubr.f32.gmra.mxu0 %v156
    %v239 = vpop.f32.mrf.mxu0
    %v240 = vadd.f32 0.0, %v239
    %v241 = vpop.f32.mrf.mxu0
    %242 = vdwg.mxu0
    %v244 = vsel %vm145, %v47, 0
    %v247 = vsel %vm145, %v48, 0
    %v250 = vsel %vm145, %v49, 0
    %v253 = vsel %vm145, %v50, 0
    %255 = vmatprep.subr.mxu0 0.0
    %256 = vmatpush1.xpose.msra.mxu0 0.0
    %257 = vmatprep.subr.mxu0 0.0
    %258 = vmatpush1.xpose.msra.mxu0 0.0
    %259 = vmatprep.subr.mxu0 0.0
    %260 = vmatpush1.xpose.msra.mxu0 0.0
    %261 = vmatprep.subr.mxu0 0.0
    %262 = vmatpush1.xpose.msra.mxu0 0.0
    %263 = vmatprep.subr.mxu0 0.0
    %264 = vmatpush1.xpose.msra.mxu0 0.0
    %265 = vmatprep.subr.mxu0 0.0
    %266 = vmatpush1.xpose.msra.mxu0 0.0
    %267 = vmatprep.subr.mxu0 0.0
    %268 = vmatpush1.xpose.msra.mxu0 0.0
    %269 = vmatprep.subr.mxu0 0.0
    %270 = vmatpush1.xpose.msra.mxu0 0.0
    %271 = vmatprep.subr.mxu0 0.0
    %272 = vmatpush1.xpose.msra.mxu0 0.0
    %273 = vmatprep.subr.mxu0 0.0
    %274 = vmatpush1.xpose.msra.mxu0 0.0
    %275 = vmatprep.subr.mxu0 0.0
    %276 = vmatpush1.xpose.msra.mxu0 0.0
    %277 = vmatprep.subr.mxu0 0.0
    %278 = vmatpush1.xpose.msra.mxu0 0.0
    %279 = vmatprep.subr.mxu0 0.0
    %280 = vmatpush1.xpose.msra.mxu0 %v253
    %281 = vmatprep.subr.mxu0 0.0
    %282 = vmatpush1.xpose.msra.mxu0 %v250
    %283 = vmatprep.subr.mxu0 0.0
    %284 = vmatpush1.xpose.msra.mxu0 %v247
    %285 = vmatprep.subr.mxu0 0.0
    %286 = vmatpush1.xpose.msra.mxu0 %v244
    %287 = vmatprep.subr.mxu0 0.0
    %288 = vmatpush2.xpose.msra.mxu0 0.0
    %289 = vmatprep.subr.mxu0 0.0
    %290 = vmatpush2.xpose.msra.mxu0 0.0
    %291 = vmatprep.subr.mxu0 0.0
    %292 = vmatpush2.xpose.msra.mxu0 0.0
    %293 = vmatprep.subr.mxu0 0.0
    %294 = vmatpush2.xpose.msra.mxu0 0.0
    %295 = vmatprep.subr.mxu0 0.0
    %296 = vmatpush2.xpose.msra.mxu0 0.0
    %297 = vmatprep.subr.mxu0 0.0
    %298 = vmatpush2.xpose.msra.mxu0 0.0
    %299 = vmatprep.subr.mxu0 0.0
    %300 = vmatpush2.xpose.msra.mxu0 0.0
    %301 = vmatprep.subr.mxu0 0.0
    %302 = vmatpush2.xpose.msra.mxu0 0.0
    %303 = vmatprep.subr.mxu0 0.0
    %304 = vmatpush2.xpose.msra.mxu0 0.0
    %305 = vmatprep.subr.mxu0 0.0
    %306 = vmatpush2.xpose.msra.mxu0 0.0
    %307 = vmatprep.subr.mxu0 0.0
    %308 = vmatpush2.xpose.msra.mxu0 0.0
    %309 = vmatprep.subr.mxu0 0.0
    %310 = vmatpush2.xpose.msra.mxu0 0.0
    %311 = vmatprep.subr.mxu0 0.0
    %312 = vmatpush2.xpose.msra.mxu0 0.0
    %313 = vmatprep.subr.mxu0 0.0
    %314 = vmatpush2.xpose.msra.mxu0 0.0
    %315 = vmatprep.subr.mxu0 0.0
    %316 = vmatpush2.xpose.msra.mxu0 0.0
    %317 = vmatprep.subr.mxu0 0.0
    %318 = vmatpush2.xpose.msra.mxu0 0.0
    %319 = vmatprep.mubr.f32.mxu0 0.0
    %320 = vmatmul.mubr.f32.gmra.mxu0 %v244
    %v321 = vpop.f32.mrf.mxu0
    %v322 = vadd.f32 0.0, %v321
    %v323 = vpop.f32.mrf.mxu0
    %324 = vmatprep.mubr.f32.mxu0 0.0
    %325 = vmatmul.mubr.f32.gmra.mxu0 %v247
    %v326 = vpop.f32.mrf.mxu0
    %v327 = vadd.f32 0.0, %v326
    %v328 = vpop.f32.mrf.mxu0
    %329 = vmatprep.mubr.f32.mxu0 0.0
    %330 = vmatmul.mubr.f32.gmra.mxu0 %v250
    %v331 = vpop.f32.mrf.mxu0
    %v332 = vadd.f32 0.0, %v331
    %v333 = vpop.f32.mrf.mxu0
    %334 = vmatprep.mubr.f32.mxu0 0.0
    %335 = vmatmul.mubr.f32.gmra.mxu0 %v253
    %v336 = vpop.f32.mrf.mxu0
    %v337 = vadd.f32 0.0, %v336
    %v338 = vpop.f32.mrf.mxu0
    %339 = vdwg.mxu0
    %v341 = vsel %vm145, %v51, 0
    %v344 = vsel %vm145, %v52, 0
    %v347 = vsel %vm145, %v53, 0
    %v350 = vsel %vm145, %v54, 0
    %352 = vmatprep.subr.mxu0 0.0
    %353 = vmatpush1.xpose.msra.mxu0 0.0
    %354 = vmatprep.subr.mxu0 0.0
    %355 = vmatpush1.xpose.msra.mxu0 0.0
    %356 = vmatprep.subr.mxu0 0.0
    %357 = vmatpush1.xpose.msra.mxu0 0.0
    %358 = vmatprep.subr.mxu0 0.0
    %359 = vmatpush1.xpose.msra.mxu0 0.0
    %360 = vmatprep.subr.mxu0 0.0
    %361 = vmatpush1.xpose.msra.mxu0 0.0
    %362 = vmatprep.subr.mxu0 0.0
    %363 = vmatpush1.xpose.msra.mxu0 0.0
    %364 = vmatprep.subr.mxu0 0.0
    %365 = vmatpush1.xpose.msra.mxu0 0.0
    %366 = vmatprep.subr.mxu0 0.0
    %367 = vmatpush1.xpose.msra.mxu0 0.0
    %368 = vmatprep.subr.mxu0 0.0
    %369 = vmatpush1.xpose.msra.mxu0 0.0
    %370 = vmatprep.subr.mxu0 0.0
    %371 = vmatpush1.xpose.msra.mxu0 0.0
    %372 = vmatprep.subr.mxu0 0.0
    %373 = vmatpush1.xpose.msra.mxu0 0.0
    %374 = vmatprep.subr.mxu0 0.0
    %375 = vmatpush1.xpose.msra.mxu0 0.0
    %376 = vmatprep.subr.mxu0 0.0
    %377 = vmatpush1.xpose.msra.mxu0 %v350
    %378 = vmatprep.subr.mxu0 0.0
    %379 = vmatpush1.xpose.msra.mxu0 %v347
    %380 = vmatprep.subr.mxu0 0.0
    %381 = vmatpush1.xpose.msra.mxu0 %v344
    %382 = vmatprep.subr.mxu0 0.0
    %383 = vmatpush1.xpose.msra.mxu0 %v341
    %384 = vmatprep.subr.mxu0 0.0
    %385 = vmatpush2.xpose.msra.mxu0 0.0
    %386 = vmatprep.subr.mxu0 0.0
    %387 = vmatpush2.xpose.msra.mxu0 0.0
    %388 = vmatprep.subr.mxu0 0.0
    %389 = vmatpush2.xpose.msra.mxu0 0.0
    %390 = vmatprep.subr.mxu0 0.0
    %391 = vmatpush2.xpose.msra.mxu0 0.0
    %392 = vmatprep.subr.mxu0 0.0
    %393 = vmatpush2.xpose.msra.mxu0 0.0
    %394 = vmatprep.subr.mxu0 0.0
    %395 = vmatpush2.xpose.msra.mxu0 0.0
    %396 = vmatprep.subr.mxu0 0.0
    %397 = vmatpush2.xpose.msra.mxu0 0.0
    %398 = vmatprep.subr.mxu0 0.0
    %399 = vmatpush2.xpose.msra.mxu0 0.0
    %400 = vmatprep.subr.mxu0 0.0
    %401 = vmatpush2.xpose.msra.mxu0 0.0
    %402 = vmatprep.subr.mxu0 0.0
    %403 = vmatpush2.xpose.msra.mxu0 0.0
    %404 = vmatprep.subr.mxu0 0.0
    %405 = vmatpush2.xpose.msra.mxu0 0.0
    %406 = vmatprep.subr.mxu0 0.0
    %407 = vmatpush2.xpose.msra.mxu0 0.0
    %408 = vmatprep.subr.mxu0 0.0
    %409 = vmatpush2.xpose.msra.mxu0 0.0
    %410 = vmatprep.subr.mxu0 0.0
    %411 = vmatpush2.xpose.msra.mxu0 0.0
    %412 = vmatprep.subr.mxu0 0.0
    %413 = vmatpush2.xpose.msra.mxu0 0.0
    %414 = vmatprep.subr.mxu0 0.0
    %415 = vmatpush2.xpose.msra.mxu0 0.0
    %416 = vmatprep.mubr.f32.mxu0 0.0
    %417 = vmatmul.mubr.f32.gmra.mxu0 %v341
    %v418 = vpop.f32.mrf.mxu0
    %v419 = vadd.f32 0.0, %v418
    %v420 = vpop.f32.mrf.mxu0
    %421 = vmatprep.mubr.f32.mxu0 0.0
    %422 = vmatmul.mubr.f32.gmra.mxu0 %v344
    %v423 = vpop.f32.mrf.mxu0
    %v424 = vadd.f32 0.0, %v423
    %v425 = vpop.f32.mrf.mxu0
    %426 = vmatprep.mubr.f32.mxu0 0.0
    %427 = vmatmul.mubr.f32.gmra.mxu0 %v347
    %v428 = vpop.f32.mrf.mxu0
    %v429 = vadd.f32 0.0, %v428
    %v430 = vpop.f32.mrf.mxu0
    %431 = vmatprep.mubr.f32.mxu0 0.0
    %432 = vmatmul.mubr.f32.gmra.mxu0 %v350
    %v433 = vpop.f32.mrf.mxu0
    %v434 = vadd.f32 0.0, %v433
    %v435 = vpop.f32.mrf.mxu0
    %436 = vdwg.mxu0
    %v438 = vsel %vm145, %v55, 0
    %v441 = vsel %vm145, %v56, 0
    %v444 = vsel %vm145, %v57, 0
    %v447 = vsel %vm145, %v58, 0
    %449 = vmatprep.subr.mxu0 0.0
    %450 = vmatpush1.xpose.msra.mxu0 0.0
    %451 = vmatprep.subr.mxu0 0.0
    %452 = vmatpush1.xpose.msra.mxu0 0.0
    %453 = vmatprep.subr.mxu0 0.0
    %454 = vmatpush1.xpose.msra.mxu0 0.0
    %455 = vmatprep.subr.mxu0 0.0
    %456 = vmatpush1.xpose.msra.mxu0 0.0
    %457 = vmatprep.subr.mxu0 0.0
    %458 = vmatpush1.xpose.msra.mxu0 0.0
    %459 = vmatprep.subr.mxu0 0.0
    %460 = vmatpush1.xpose.msra.mxu0 0.0
    %461 = vmatprep.subr.mxu0 0.0
    %462 = vmatpush1.xpose.msra.mxu0 0.0
    %463 = vmatprep.subr.mxu0 0.0
    %464 = vmatpush1.xpose.msra.mxu0 0.0
    %465 = vmatprep.subr.mxu0 0.0
    %466 = vmatpush1.xpose.msra.mxu0 0.0
    %467 = vmatprep.subr.mxu0 0.0
    %468 = vmatpush1.xpose.msra.mxu0 0.0
    %469 = vmatprep.subr.mxu0 0.0
    %470 = vmatpush1.xpose.msra.mxu0 0.0
    %471 = vmatprep.subr.mxu0 0.0
    %472 = vmatpush1.xpose.msra.mxu0 0.0
    %473 = vmatprep.subr.mxu0 0.0
    %474 = vmatpush1.xpose.msra.mxu0 %v447
    %475 = vmatprep.subr.mxu0 0.0
    %476 = vmatpush1.xpose.msra.mxu0 %v444
    %477 = vmatprep.subr.mxu0 0.0
    %478 = vmatpush1.xpose.msra.mxu0 %v441
    %479 = vmatprep.subr.mxu0 0.0
    %480 = vmatpush1.xpose.msra.mxu0 %v438
    %481 = vmatprep.subr.mxu0 0.0
    %482 = vmatpush2.xpose.msra.mxu0 0.0
    %483 = vmatprep.subr.mxu0 0.0
    %484 = vmatpush2.xpose.msra.mxu0 0.0
    %485 = vmatprep.subr.mxu0 0.0
    %486 = vmatpush2.xpose.msra.mxu0 0.0
    %487 = vmatprep.subr.mxu0 0.0
    %488 = vmatpush2.xpose.msra.mxu0 0.0
    %489 = vmatprep.subr.mxu0 0.0
    %490 = vmatpush2.xpose.msra.mxu0 0.0
    %491 = vmatprep.subr.mxu0 0.0
    %492 = vmatpush2.xpose.msra.mxu0 0.0
    %493 = vmatprep.subr.mxu0 0.0
    %494 = vmatpush2.xpose.msra.mxu0 0.0
    %495 = vmatprep.subr.mxu0 0.0
    %496 = vmatpush2.xpose.msra.mxu0 0.0
    %497 = vmatprep.subr.mxu0 0.0
    %498 = vmatpush2.xpose.msra.mxu0 0.0
    %499 = vmatprep.subr.mxu0 0.0
    %500 = vmatpush2.xpose.msra.mxu0 0.0
    %501 = vmatprep.subr.mxu0 0.0
    %502 = vmatpush2.xpose.msra.mxu0 0.0
    %503 = vmatprep.subr.mxu0 0.0
    %504 = vmatpush2.xpose.msra.mxu0 0.0
    %505 = vmatprep.subr.mxu0 0.0
    %506 = vmatpush2.xpose.msra.mxu0 0.0
    %507 = vmatprep.subr.mxu0 0.0
    %508 = vmatpush2.xpose.msra.mxu0 0.0
    %509 = vmatprep.subr.mxu0 0.0
    %510 = vmatpush2.xpose.msra.mxu0 0.0
    %511 = vmatprep.subr.mxu0 0.0
    %512 = vmatpush2.xpose.msra.mxu0 0.0
    %513 = vmatprep.mubr.f32.mxu0 0.0
    %514 = vmatmul.mubr.f32.gmra.mxu0 %v438
    %v515 = vpop.f32.mrf.mxu0
    %v516 = vadd.f32 0.0, %v515
    %v517 = vpop.f32.mrf.mxu0
    %518 = vmatprep.mubr.f32.mxu0 0.0
    %519 = vmatmul.mubr.f32.gmra.mxu0 %v441
    %v520 = vpop.f32.mrf.mxu0
    %v521 = vadd.f32 0.0, %v520
    %v522 = vpop.f32.mrf.mxu0
    %523 = vmatprep.mubr.f32.mxu0 0.0
    %524 = vmatmul.mubr.f32.gmra.mxu0 %v444
    %v525 = vpop.f32.mrf.mxu0
    %v526 = vadd.f32 0.0, %v525
    %v527 = vpop.f32.mrf.mxu0
    %528 = vmatprep.mubr.f32.mxu0 0.0
    %529 = vmatmul.mubr.f32.gmra.mxu0 %v447
    %v530 = vpop.f32.mrf.mxu0
    %v531 = vadd.f32 0.0, %v530
    %v532 = vpop.f32.mrf.mxu0
    %533 = vdwg.mxu0
    %v535 = vsel %vm145, %v59, 0
    %v538 = vsel %vm145, %v60, 0
    %v541 = vsel %vm145, %v61, 0
    %v544 = vsel %vm145, %v62, 0
    %546 = vmatprep.subr.mxu0 0.0
    %547 = vmatpush1.xpose.msra.mxu0 0.0
    %548 = vmatprep.subr.mxu0 0.0
    %549 = vmatpush1.xpose.msra.mxu0 0.0
    %550 = vmatprep.subr.mxu0 0.0
    %551 = vmatpush1.xpose.msra.mxu0 0.0
    %552 = vmatprep.subr.mxu0 0.0
    %553 = vmatpush1.xpose.msra.mxu0 0.0
    %554 = vmatprep.subr.mxu0 0.0
    %555 = vmatpush1.xpose.msra.mxu0 0.0
    %556 = vmatprep.subr.mxu0 0.0
    %557 = vmatpush1.xpose.msra.mxu0 0.0
    %558 = vmatprep.subr.mxu0 0.0
    %559 = vmatpush1.xpose.msra.mxu0 0.0
    %560 = vmatprep.subr.mxu0 0.0
    %561 = vmatpush1.xpose.msra.mxu0 0.0
    %562 = vmatprep.subr.mxu0 0.0
    %563 = vmatpush1.xpose.msra.mxu0 0.0
    %564 = vmatprep.subr.mxu0 0.0
    %565 = vmatpush1.xpose.msra.mxu0 0.0
    %566 = vmatprep.subr.mxu0 0.0
    %567 = vmatpush1.xpose.msra.mxu0 0.0
    %568 = vmatprep.subr.mxu0 0.0
    %569 = vmatpush1.xpose.msra.mxu0 0.0
    %570 = vmatprep.subr.mxu0 0.0
    %571 = vmatpush1.xpose.msra.mxu0 %v544
    %572 = vmatprep.subr.mxu0 0.0
    %573 = vmatpush1.xpose.msra.mxu0 %v541
    %574 = vmatprep.subr.mxu0 0.0
    %575 = vmatpush1.xpose.msra.mxu0 %v538
    %576 = vmatprep.subr.mxu0 0.0
    %577 = vmatpush1.xpose.msra.mxu0 %v535
    %578 = vmatprep.subr.mxu0 0.0
    %579 = vmatpush2.xpose.msra.mxu0 0.0
    %580 = vmatprep.subr.mxu0 0.0
    %581 = vmatpush2.xpose.msra.mxu0 0.0
    %582 = vmatprep.subr.mxu0 0.0
    %583 = vmatpush2.xpose.msra.mxu0 0.0
    %584 = vmatprep.subr.mxu0 0.0
    %585 = vmatpush2.xpose.msra.mxu0 0.0
    %586 = vmatprep.subr.mxu0 0.0
    %587 = vmatpush2.xpose.msra.mxu0 0.0
    %588 = vmatprep.subr.mxu0 0.0
    %589 = vmatpush2.xpose.msra.mxu0 0.0
    %590 = vmatprep.subr.mxu0 0.0
    %591 = vmatpush2.xpose.msra.mxu0 0.0
    %592 = vmatprep.subr.mxu0 0.0
    %593 = vmatpush2.xpose.msra.mxu0 0.0
    %594 = vmatprep.subr.mxu0 0.0
    %595 = vmatpush2.xpose.msra.mxu0 0.0
    %596 = vmatprep.subr.mxu0 0.0
    %597 = vmatpush2.xpose.msra.mxu0 0.0
    %598 = vmatprep.subr.mxu0 0.0
    %599 = vmatpush2.xpose.msra.mxu0 0.0
    %600 = vmatprep.subr.mxu0 0.0
    %601 = vmatpush2.xpose.msra.mxu0 0.0
    %602 = vmatprep.subr.mxu0 0.0
    %603 = vmatpush2.xpose.msra.mxu0 0.0
    %604 = vmatprep.subr.mxu0 0.0
    %605 = vmatpush2.xpose.msra.mxu0 0.0
    %606 = vmatprep.subr.mxu0 0.0
    %607 = vmatpush2.xpose.msra.mxu0 0.0
    %608 = vmatprep.subr.mxu0 0.0
    %609 = vmatpush2.xpose.msra.mxu0 0.0
    %610 = vmatprep.mubr.f32.mxu0 0.0
    %611 = vmatmul.mubr.f32.gmra.mxu0 %v535
    %v612 = vpop.f32.mrf.mxu0
    %v613 = vadd.f32 0.0, %v612
    %v614 = vpop.f32.mrf.mxu0
    %615 = vmatprep.mubr.f32.mxu0 0.0
    %616 = vmatmul.mubr.f32.gmra.mxu0 %v538
    %v617 = vpop.f32.mrf.mxu0
    %v618 = vadd.f32 0.0, %v617
    %v619 = vpop.f32.mrf.mxu0
    %620 = vmatprep.mubr.f32.mxu0 0.0
    %621 = vmatmul.mubr.f32.gmra.mxu0 %v541
    %v622 = vpop.f32.mrf.mxu0
    %v623 = vadd.f32 0.0, %v622
    %v624 = vpop.f32.mrf.mxu0
    %625 = vmatprep.mubr.f32.mxu0 0.0
    %626 = vmatmul.mubr.f32.gmra.mxu0 %v544
    %v627 = vpop.f32.mrf.mxu0
    %v628 = vadd.f32 0.0, %v627
    %v629 = vpop.f32.mrf.mxu0
    %630 = vdwg.mxu0
    %v632 = vsel %vm145, %v63, 0
    %v635 = vsel %vm145, %v64, 0
    %v638 = vsel %vm145, %v65, 0
    %v641 = vsel %vm145, %v66, 0
    %643 = vmatprep.subr.mxu0 0.0
    %644 = vmatpush1.xpose.msra.mxu0 0.0
    %645 = vmatprep.subr.mxu0 0.0
    %646 = vmatpush1.xpose.msra.mxu0 0.0
    %647 = vmatprep.subr.mxu0 0.0
    %648 = vmatpush1.xpose.msra.mxu0 0.0
    %649 = vmatprep.subr.mxu0 0.0
    %650 = vmatpush1.xpose.msra.mxu0 0.0
    %651 = vmatprep.subr.mxu0 0.0
    %652 = vmatpush1.xpose.msra.mxu0 0.0
    %653 = vmatprep.subr.mxu0 0.0
    %654 = vmatpush1.xpose.msra.mxu0 0.0
    %655 = vmatprep.subr.mxu0 0.0
    %656 = vmatpush1.xpose.msra.mxu0 0.0
    %657 = vmatprep.subr.mxu0 0.0
    %658 = vmatpush1.xpose.msra.mxu0 0.0
    %659 = vmatprep.subr.mxu0 0.0
    %660 = vmatpush1.xpose.msra.mxu0 0.0
    %661 = vmatprep.subr.mxu0 0.0
    %662 = vmatpush1.xpose.msra.mxu0 0.0
    %663 = vmatprep.subr.mxu0 0.0
    %664 = vmatpush1.xpose.msra.mxu0 0.0
    %665 = vmatprep.subr.mxu0 0.0
    %666 = vmatpush1.xpose.msra.mxu0 0.0
    %667 = vmatprep.subr.mxu0 0.0
    %668 = vmatpush1.xpose.msra.mxu0 %v641
    %669 = vmatprep.subr.mxu0 0.0
    %670 = vmatpush1.xpose.msra.mxu0 %v638
    %671 = vmatprep.subr.mxu0 0.0
    %672 = vmatpush1.xpose.msra.mxu0 %v635
    %673 = vmatprep.subr.mxu0 0.0
    %674 = vmatpush1.xpose.msra.mxu0 %v632
    %675 = vmatprep.subr.mxu0 0.0
    %676 = vmatpush2.xpose.msra.mxu0 0.0
    %677 = vmatprep.subr.mxu0 0.0
    %678 = vmatpush2.xpose.msra.mxu0 0.0
    %679 = vmatprep.subr.mxu0 0.0
    %680 = vmatpush2.xpose.msra.mxu0 0.0
    %681 = vmatprep.subr.mxu0 0.0
    %682 = vmatpush2.xpose.msra.mxu0 0.0
    %683 = vmatprep.subr.mxu0 0.0
    %684 = vmatpush2.xpose.msra.mxu0 0.0
    %685 = vmatprep.subr.mxu0 0.0
    %686 = vmatpush2.xpose.msra.mxu0 0.0
    %687 = vmatprep.subr.mxu0 0.0
    %688 = vmatpush2.xpose.msra.mxu0 0.0
    %689 = vmatprep.subr.mxu0 0.0
    %690 = vmatpush2.xpose.msra.mxu0 0.0
    %691 = vmatprep.subr.mxu0 0.0
    %692 = vmatpush2.xpose.msra.mxu0 0.0
    %693 = vmatprep.subr.mxu0 0.0
    %694 = vmatpush2.xpose.msra.mxu0 0.0
    %695 = vmatprep.subr.mxu0 0.0
    %696 = vmatpush2.xpose.msra.mxu0 0.0
    %697 = vmatprep.subr.mxu0 0.0
    %698 = vmatpush2.xpose.msra.mxu0 0.0
    %699 = vmatprep.subr.mxu0 0.0
    %700 = vmatpush2.xpose.msra.mxu0 0.0
    %701 = vmatprep.subr.mxu0 0.0
    %702 = vmatpush2.xpose.msra.mxu0 0.0
    %703 = vmatprep.subr.mxu0 0.0
    %704 = vmatpush2.xpose.msra.mxu0 0.0
    %705 = vmatprep.subr.mxu0 0.0
    %706 = vmatpush2.xpose.msra.mxu0 0.0
    %707 = vmatprep.mubr.f32.mxu0 0.0
    %708 = vmatmul.mubr.f32.gmra.mxu0 %v632
    %v709 = vpop.f32.mrf.mxu0
    %v710 = vadd.f32 0.0, %v709
    %v711 = vpop.f32.mrf.mxu0
    %712 = vmatprep.mubr.f32.mxu0 0.0
    %713 = vmatmul.mubr.f32.gmra.mxu0 %v635
    %v714 = vpop.f32.mrf.mxu0
    %v715 = vadd.f32 0.0, %v714
    %v716 = vpop.f32.mrf.mxu0
    %717 = vmatprep.mubr.f32.mxu0 0.0
    %718 = vmatmul.mubr.f32.gmra.mxu0 %v638
    %v719 = vpop.f32.mrf.mxu0
    %v720 = vadd.f32 0.0, %v719
    %v721 = vpop.f32.mrf.mxu0
    %722 = vmatprep.mubr.f32.mxu0 0.0
    %723 = vmatmul.mubr.f32.gmra.mxu0 %v641
    %v724 = vpop.f32.mrf.mxu0
    %v725 = vadd.f32 0.0, %v724
    %v726 = vpop.f32.mrf.mxu0
    %727 = vdwg.mxu0
    %v729 = vsel %vm145, %v67, 0
    %v732 = vsel %vm145, %v68, 0
    %v735 = vsel %vm145, %v69, 0
    %v738 = vsel %vm145, %v70, 0
    %740 = vmatprep.subr.mxu0 0.0
    %741 = vmatpush1.xpose.msra.mxu0 0.0
    %742 = vmatprep.subr.mxu0 0.0
    %743 = vmatpush1.xpose.msra.mxu0 0.0
    %744 = vmatprep.subr.mxu0 0.0
    %745 = vmatpush1.xpose.msra.mxu0 0.0
    %746 = vmatprep.subr.mxu0 0.0
    %747 = vmatpush1.xpose.msra.mxu0 0.0
    %748 = vmatprep.subr.mxu0 0.0
    %749 = vmatpush1.xpose.msra.mxu0 0.0
    %750 = vmatprep.subr.mxu0 0.0
    %751 = vmatpush1.xpose.msra.mxu0 0.0
    %752 = vmatprep.subr.mxu0 0.0
    %753 = vmatpush1.xpose.msra.mxu0 0.0
    %754 = vmatprep.subr.mxu0 0.0
    %755 = vmatpush1.xpose.msra.mxu0 0.0
    %756 = vmatprep.subr.mxu0 0.0
    %757 = vmatpush1.xpose.msra.mxu0 0.0
    %758 = vmatprep.subr.mxu0 0.0
    %759 = vmatpush1.xpose.msra.mxu0 0.0
    %760 = vmatprep.subr.mxu0 0.0
    %761 = vmatpush1.xpose.msra.mxu0 0.0
    %762 = vmatprep.subr.mxu0 0.0
    %763 = vmatpush1.xpose.msra.mxu0 0.0
    %764 = vmatprep.subr.mxu0 0.0
    %765 = vmatpush1.xpose.msra.mxu0 %v738
    %766 = vmatprep.subr.mxu0 0.0
    %767 = vmatpush1.xpose.msra.mxu0 %v735
    %768 = vmatprep.subr.mxu0 0.0
    %769 = vmatpush1.xpose.msra.mxu0 %v732
    %770 = vmatprep.subr.mxu0 0.0
    %771 = vmatpush1.xpose.msra.mxu0 %v729
    %772 = vmatprep.subr.mxu0 0.0
    %773 = vmatpush2.xpose.msra.mxu0 0.0
    %774 = vmatprep.subr.mxu0 0.0
    %775 = vmatpush2.xpose.msra.mxu0 0.0
    %776 = vmatprep.subr.mxu0 0.0
    %777 = vmatpush2.xpose.msra.mxu0 0.0
    %778 = vmatprep.subr.mxu0 0.0
    %779 = vmatpush2.xpose.msra.mxu0 0.0
    %780 = vmatprep.subr.mxu0 0.0
    %781 = vmatpush2.xpose.msra.mxu0 0.0
    %782 = vmatprep.subr.mxu0 0.0
    %783 = vmatpush2.xpose.msra.mxu0 0.0
    %784 = vmatprep.subr.mxu0 0.0
    %785 = vmatpush2.xpose.msra.mxu0 0.0
    %786 = vmatprep.subr.mxu0 0.0
    %787 = vmatpush2.xpose.msra.mxu0 0.0
    %788 = vmatprep.subr.mxu0 0.0
    %789 = vmatpush2.xpose.msra.mxu0 0.0
    %790 = vmatprep.subr.mxu0 0.0
    %791 = vmatpush2.xpose.msra.mxu0 0.0
    %792 = vmatprep.subr.mxu0 0.0
    %793 = vmatpush2.xpose.msra.mxu0 0.0
    %794 = vmatprep.subr.mxu0 0.0
    %795 = vmatpush2.xpose.msra.mxu0 0.0
    %796 = vmatprep.subr.mxu0 0.0
    %797 = vmatpush2.xpose.msra.mxu0 0.0
    %798 = vmatprep.subr.mxu0 0.0
    %799 = vmatpush2.xpose.msra.mxu0 0.0
    %800 = vmatprep.subr.mxu0 0.0
    %801 = vmatpush2.xpose.msra.mxu0 0.0
    %802 = vmatprep.subr.mxu0 0.0
    %803 = vmatpush2.xpose.msra.mxu0 0.0
    %804 = vmatprep.mubr.f32.mxu0 0.0
    %805 = vmatmul.mubr.f32.gmra.mxu0 %v729
    %v806 = vpop.f32.mrf.mxu0
    %v807 = vadd.f32 0.0, %v806
    %v808 = vpop.f32.mrf.mxu0
    %809 = vmatprep.mubr.f32.mxu0 0.0
    %810 = vmatmul.mubr.f32.gmra.mxu0 %v732
    %v811 = vpop.f32.mrf.mxu0
    %v812 = vadd.f32 0.0, %v811
    %v813 = vpop.f32.mrf.mxu0
    %814 = vmatprep.mubr.f32.mxu0 0.0
    %815 = vmatmul.mubr.f32.gmra.mxu0 %v735
    %v816 = vpop.f32.mrf.mxu0
    %v817 = vadd.f32 0.0, %v816
    %v818 = vpop.f32.mrf.mxu0
    %819 = vmatprep.mubr.f32.mxu0 0.0
    %820 = vmatmul.mubr.f32.gmra.mxu0 %v738
    %v821 = vpop.f32.mrf.mxu0
    %v822 = vadd.f32 0.0, %v821
    %v823 = vpop.f32.mrf.mxu0
    %824 = vdwg.mxu0
    %v826 = vsel %vm145, %v71, 0
    %v829 = vsel %vm145, %v72, 0
    %v832 = vsel %vm145, %v73, 0
    %v835 = vsel %vm145, %v74, 0
    %837 = vmatprep.subr.mxu0 0.0
    %838 = vmatpush1.xpose.msra.mxu0 0.0
    %839 = vmatprep.subr.mxu0 0.0
    %840 = vmatpush1.xpose.msra.mxu0 0.0
    %841 = vmatprep.subr.mxu0 0.0
    %842 = vmatpush1.xpose.msra.mxu0 0.0
    %843 = vmatprep.subr.mxu0 0.0
    %844 = vmatpush1.xpose.msra.mxu0 0.0
    %845 = vmatprep.subr.mxu0 0.0
    %846 = vmatpush1.xpose.msra.mxu0 0.0
    %847 = vmatprep.subr.mxu0 0.0
    %848 = vmatpush1.xpose.msra.mxu0 0.0
    %849 = vmatprep.subr.mxu0 0.0
    %850 = vmatpush1.xpose.msra.mxu0 0.0
    %851 = vmatprep.subr.mxu0 0.0
    %852 = vmatpush1.xpose.msra.mxu0 0.0
    %853 = vmatprep.subr.mxu0 0.0
    %854 = vmatpush1.xpose.msra.mxu0 0.0
    %855 = vmatprep.subr.mxu0 0.0
    %856 = vmatpush1.xpose.msra.mxu0 0.0
    %857 = vmatprep.subr.mxu0 0.0
    %858 = vmatpush1.xpose.msra.mxu0 0.0
    %859 = vmatprep.subr.mxu0 0.0
    %860 = vmatpush1.xpose.msra.mxu0 0.0
    %861 = vmatprep.subr.mxu0 0.0
    %862 = vmatpush1.xpose.msra.mxu0 %v835
    %863 = vmatprep.subr.mxu0 0.0
    %864 = vmatpush1.xpose.msra.mxu0 %v832
    %865 = vmatprep.subr.mxu0 0.0
    %866 = vmatpush1.xpose.msra.mxu0 %v829
    %867 = vmatprep.subr.mxu0 0.0
    %868 = vmatpush1.xpose.msra.mxu0 %v826
    %869 = vmatprep.subr.mxu0 0.0
    %870 = vmatpush2.xpose.msra.mxu0 0.0
    %871 = vmatprep.subr.mxu0 0.0
    %872 = vmatpush2.xpose.msra.mxu0 0.0
    %873 = vmatprep.subr.mxu0 0.0
    %874 = vmatpush2.xpose.msra.mxu0 0.0
    %875 = vmatprep.subr.mxu0 0.0
    %876 = vmatpush2.xpose.msra.mxu0 0.0
    %877 = vmatprep.subr.mxu0 0.0
    %878 = vmatpush2.xpose.msra.mxu0 0.0
    %879 = vmatprep.subr.mxu0 0.0
    %880 = vmatpush2.xpose.msra.mxu0 0.0
    %881 = vmatprep.subr.mxu0 0.0
    %882 = vmatpush2.xpose.msra.mxu0 0.0
    %883 = vmatprep.subr.mxu0 0.0
    %884 = vmatpush2.xpose.msra.mxu0 0.0
    %885 = vmatprep.subr.mxu0 0.0
    %886 = vmatpush2.xpose.msra.mxu0 0.0
    %887 = vmatprep.subr.mxu0 0.0
    %888 = vmatpush2.xpose.msra.mxu0 0.0
    %889 = vmatprep.subr.mxu0 0.0
    %890 = vmatpush2.xpose.msra.mxu0 0.0
    %891 = vmatprep.subr.mxu0 0.0
    %892 = vmatpush2.xpose.msra.mxu0 0.0
    %893 = vmatprep.subr.mxu0 0.0
    %894 = vmatpush2.xpose.msra.mxu0 0.0
    %895 = vmatprep.subr.mxu0 0.0
    %896 = vmatpush2.xpose.msra.mxu0 0.0
    %897 = vmatprep.subr.mxu0 0.0
    %898 = vmatpush2.xpose.msra.mxu0 0.0
    %899 = vmatprep.subr.mxu0 0.0
    %900 = vmatpush2.xpose.msra.mxu0 0.0
    %901 = vmatprep.mubr.f32.mxu0 0.0
    %902 = vmatmul.mubr.f32.gmra.mxu0 %v826
    %v903 = vpop.f32.mrf.mxu0
    %v904 = vadd.f32 0.0, %v903
    %v905 = vpop.f32.mrf.mxu0
    %906 = vmatprep.mubr.f32.mxu0 0.0
    %907 = vmatmul.mubr.f32.gmra.mxu0 %v829
    %v908 = vpop.f32.mrf.mxu0
    %v909 = vadd.f32 0.0, %v908
    %v910 = vpop.f32.mrf.mxu0
    %911 = vmatprep.mubr.f32.mxu0 0.0
    %912 = vmatmul.mubr.f32.gmra.mxu0 %v832
    %v913 = vpop.f32.mrf.mxu0
    %v914 = vadd.f32 0.0, %v913
    %v915 = vpop.f32.mrf.mxu0
    %916 = vmatprep.mubr.f32.mxu0 0.0
    %917 = vmatmul.mubr.f32.gmra.mxu0 %v835
    %v918 = vpop.f32.mrf.mxu0
    %v919 = vadd.f32 0.0, %v918
    %v920 = vpop.f32.mrf.mxu0
    %921 = vdwg.mxu0
    %v923 = vsel %vm145, %v75, 0
    %v926 = vsel %vm145, %v76, 0
    %v929 = vsel %vm145, %v77, 0
    %v932 = vsel %vm145, %v78, 0
    %934 = vmatprep.subr.mxu0 0.0
    %935 = vmatpush1.xpose.msra.mxu0 0.0
    %936 = vmatprep.subr.mxu0 0.0
    %937 = vmatpush1.xpose.msra.mxu0 0.0
    %938 = vmatprep.subr.mxu0 0.0
    %939 = vmatpush1.xpose.msra.mxu0 0.0
    %940 = vmatprep.subr.mxu0 0.0
    %941 = vmatpush1.xpose.msra.mxu0 0.0
    %942 = vmatprep.subr.mxu0 0.0
    %943 = vmatpush1.xpose.msra.mxu0 0.0
    %944 = vmatprep.subr.mxu0 0.0
    %945 = vmatpush1.xpose.msra.mxu0 0.0
    %946 = vmatprep.subr.mxu0 0.0
    %947 = vmatpush1.xpose.msra.mxu0 0.0
    %948 = vmatprep.subr.mxu0 0.0
    %949 = vmatpush1.xpose.msra.mxu0 0.0
    %950 = vmatprep.subr.mxu0 0.0
    %951 = vmatpush1.xpose.msra.mxu0 0.0
    %952 = vmatprep.subr.mxu0 0.0
    %953 = vmatpush1.xpose.msra.mxu0 0.0
    %954 = vmatprep.subr.mxu0 0.0
    %955 = vmatpush1.xpose.msra.mxu0 0.0
    %956 = vmatprep.subr.mxu0 0.0
    %957 = vmatpush1.xpose.msra.mxu0 0.0
    %958 = vmatprep.subr.mxu0 0.0
    %959 = vmatpush1.xpose.msra.mxu0 %v932
    %960 = vmatprep.subr.mxu0 0.0
    %961 = vmatpush1.xpose.msra.mxu0 %v929
    %962 = vmatprep.subr.mxu0 0.0
    %963 = vmatpush1.xpose.msra.mxu0 %v926
    %964 = vmatprep.subr.mxu0 0.0
    %965 = vmatpush1.xpose.msra.mxu0 %v923
    %966 = vmatprep.subr.mxu0 0.0
    %967 = vmatpush2.xpose.msra.mxu0 0.0
    %968 = vmatprep.subr.mxu0 0.0
    %969 = vmatpush2.xpose.msra.mxu0 0.0
    %970 = vmatprep.subr.mxu0 0.0
    %971 = vmatpush2.xpose.msra.mxu0 0.0
    %972 = vmatprep.subr.mxu0 0.0
    %973 = vmatpush2.xpose.msra.mxu0 0.0
    %974 = vmatprep.subr.mxu0 0.0
    %975 = vmatpush2.xpose.msra.mxu0 0.0
    %976 = vmatprep.subr.mxu0 0.0
    %977 = vmatpush2.xpose.msra.mxu0 0.0
    %978 = vmatprep.subr.mxu0 0.0
    %979 = vmatpush2.xpose.msra.mxu0 0.0
    %980 = vmatprep.subr.mxu0 0.0
    %981 = vmatpush2.xpose.msra.mxu0 0.0
    %982 = vmatprep.subr.mxu0 0.0
    %983 = vmatpush2.xpose.msra.mxu0 0.0
    %984 = vmatprep.subr.mxu0 0.0
    %985 = vmatpush2.xpose.msra.mxu0 0.0
    %986 = vmatprep.subr.mxu0 0.0
    %987 = vmatpush2.xpose.msra.mxu0 0.0
    %988 = vmatprep.subr.mxu0 0.0
    %989 = vmatpush2.xpose.msra.mxu0 0.0
    %990 = vmatprep.subr.mxu0 0.0
    %991 = vmatpush2.xpose.msra.mxu0 0.0
    %992 = vmatprep.subr.mxu0 0.0
    %993 = vmatpush2.xpose.msra.mxu0 0.0
    %994 = vmatprep.subr.mxu0 0.0
    %995 = vmatpush2.xpose.msra.mxu0 0.0
    %996 = vmatprep.subr.mxu0 0.0
    %997 = vmatpush2.xpose.msra.mxu0 0.0
    %998 = vmatprep.mubr.f32.mxu0 0.0
    %999 = vmatmul.mubr.f32.gmra.mxu0 %v923
    %v1000 = vpop.f32.mrf.mxu0
    %v1001 = vadd.f32 0.0, %v1000
    %v1002 = vpop.f32.mrf.mxu0
    %1003 = vmatprep.mubr.f32.mxu0 0.0
    %1004 = vmatmul.mubr.f32.gmra.mxu0 %v926
    %v1005 = vpop.f32.mrf.mxu0
    %v1006 = vadd.f32 0.0, %v1005
    %v1007 = vpop.f32.mrf.mxu0
    %1008 = vmatprep.mubr.f32.mxu0 0.0
    %1009 = vmatmul.mubr.f32.gmra.mxu0 %v929
    %v1010 = vpop.f32.mrf.mxu0
    %v1011 = vadd.f32 0.0, %v1010
    %v1012 = vpop.f32.mrf.mxu0
    %1013 = vmatprep.mubr.f32.mxu0 0.0
    %1014 = vmatmul.mubr.f32.gmra.mxu0 %v932
    %v1015 = vpop.f32.mrf.mxu0
    %v1016 = vadd.f32 0.0, %v1015
    %v1017 = vpop.f32.mrf.mxu0
    %1018 = vdwg.mxu0
    %v1020 = vsel %vm145, %v79, 0
    %v1023 = vsel %vm145, %v80, 0
    %v1026 = vsel %vm145, %v81, 0
    %v1029 = vsel %vm145, %v82, 0
    %1031 = vmatprep.subr.mxu0 0.0
    %1032 = vmatpush1.xpose.msra.mxu0 0.0
    %1033 = vmatprep.subr.mxu0 0.0
    %1034 = vmatpush1.xpose.msra.mxu0 0.0
    %1035 = vmatprep.subr.mxu0 0.0
    %1036 = vmatpush1.xpose.msra.mxu0 0.0
    %1037 = vmatprep.subr.mxu0 0.0
    %1038 = vmatpush1.xpose.msra.mxu0 0.0
    %1039 = vmatprep.subr.mxu0 0.0
    %1040 = vmatpush1.xpose.msra.mxu0 0.0
    %1041 = vmatprep.subr.mxu0 0.0
    %1042 = vmatpush1.xpose.msra.mxu0 0.0
    %1043 = vmatprep.subr.mxu0 0.0
    %1044 = vmatpush1.xpose.msra.mxu0 0.0
    %1045 = vmatprep.subr.mxu0 0.0
    %1046 = vmatpush1.xpose.msra.mxu0 0.0
    %1047 = vmatprep.subr.mxu0 0.0
    %1048 = vmatpush1.xpose.msra.mxu0 0.0
    %1049 = vmatprep.subr.mxu0 0.0
    %1050 = vmatpush1.xpose.msra.mxu0 0.0
    %1051 = vmatprep.subr.mxu0 0.0
    %1052 = vmatpush1.xpose.msra.mxu0 0.0
    %1053 = vmatprep.subr.mxu0 0.0
    %1054 = vmatpush1.xpose.msra.mxu0 0.0
    %1055 = vmatprep.subr.mxu0 0.0
    %1056 = vmatpush1.xpose.msra.mxu0 %v1029
    %1057 = vmatprep.subr.mxu0 0.0
    %1058 = vmatpush1.xpose.msra.mxu0 %v1026
    %1059 = vmatprep.subr.mxu0 0.0
    %1060 = vmatpush1.xpose.msra.mxu0 %v1023
    %1061 = vmatprep.subr.mxu0 0.0
    %1062 = vmatpush1.xpose.msra.mxu0 %v1020
    %1063 = vmatprep.subr.mxu0 0.0
    %1064 = vmatpush2.xpose.msra.mxu0 0.0
    %1065 = vmatprep.subr.mxu0 0.0
    %1066 = vmatpush2.xpose.msra.mxu0 0.0
    %1067 = vmatprep.subr.mxu0 0.0
    %1068 = vmatpush2.xpose.msra.mxu0 0.0
    %1069 = vmatprep.subr.mxu0 0.0
    %1070 = vmatpush2.xpose.msra.mxu0 0.0
    %1071 = vmatprep.subr.mxu0 0.0
    %1072 = vmatpush2.xpose.msra.mxu0 0.0
    %1073 = vmatprep.subr.mxu0 0.0
    %1074 = vmatpush2.xpose.msra.mxu0 0.0
    %1075 = vmatprep.subr.mxu0 0.0
    %1076 = vmatpush2.xpose.msra.mxu0 0.0
    %1077 = vmatprep.subr.mxu0 0.0
    %1078 = vmatpush2.xpose.msra.mxu0 0.0
    %1079 = vmatprep.subr.mxu0 0.0
    %1080 = vmatpush2.xpose.msra.mxu0 0.0
    %1081 = vmatprep.subr.mxu0 0.0
    %1082 = vmatpush2.xpose.msra.mxu0 0.0
    %1083 = vmatprep.subr.mxu0 0.0
    %1084 = vmatpush2.xpose.msra.mxu0 0.0
    %1085 = vmatprep.subr.mxu0 0.0
    %1086 = vmatpush2.xpose.msra.mxu0 0.0
    %1087 = vmatprep.subr.mxu0 0.0
    %1088 = vmatpush2.xpose.msra.mxu0 0.0
    %1089 = vmatprep.subr.mxu0 0.0
    %1090 = vmatpush2.xpose.msra.mxu0 0.0
    %1091 = vmatprep.subr.mxu0 0.0
    %1092 = vmatpush2.xpose.msra.mxu0 0.0
    %1093 = vmatprep.subr.mxu0 0.0
    %1094 = vmatpush2.xpose.msra.mxu0 0.0
    %1095 = vmatprep.mubr.f32.mxu0 0.0
    %1096 = vmatmul.mubr.f32.gmra.mxu0 %v1020
    %v1097 = vpop.f32.mrf.mxu0
    %v1098 = vadd.f32 0.0, %v1097
    %v1099 = vpop.f32.mrf.mxu0
    %1100 = vmatprep.mubr.f32.mxu0 0.0
    %1101 = vmatmul.mubr.f32.gmra.mxu0 %v1023
    %v1102 = vpop.f32.mrf.mxu0
    %v1103 = vadd.f32 0.0, %v1102
    %v1104 = vpop.f32.mrf.mxu0
    %1105 = vmatprep.mubr.f32.mxu0 0.0
    %1106 = vmatmul.mubr.f32.gmra.mxu0 %v1026
    %v1107 = vpop.f32.mrf.mxu0
    %v1108 = vadd.f32 0.0, %v1107
    %v1109 = vpop.f32.mrf.mxu0
    %1110 = vmatprep.mubr.f32.mxu0 0.0
    %1111 = vmatmul.mubr.f32.gmra.mxu0 %v1029
    %v1112 = vpop.f32.mrf.mxu0
    %v1113 = vadd.f32 0.0, %v1112
    %v1114 = vpop.f32.mrf.mxu0
    %1115 = vdwg.mxu0
    %v1117 = vsel %vm145, %v83, 0
    %v1120 = vsel %vm145, %v84, 0
    %v1123 = vsel %vm145, %v85, 0
    %v1126 = vsel %vm145, %v86, 0
    %1128 = vmatprep.subr.mxu0 0.0
    %1129 = vmatpush1.xpose.msra.mxu0 0.0
    %1130 = vmatprep.subr.mxu0 0.0
    %1131 = vmatpush1.xpose.msra.mxu0 0.0
    %1132 = vmatprep.subr.mxu0 0.0
    %1133 = vmatpush1.xpose.msra.mxu0 0.0
    %1134 = vmatprep.subr.mxu0 0.0
    %1135 = vmatpush1.xpose.msra.mxu0 0.0
    %1136 = vmatprep.subr.mxu0 0.0
    %1137 = vmatpush1.xpose.msra.mxu0 0.0
    %1138 = vmatprep.subr.mxu0 0.0
    %1139 = vmatpush1.xpose.msra.mxu0 0.0
    %1140 = vmatprep.subr.mxu0 0.0
    %1141 = vmatpush1.xpose.msra.mxu0 0.0
    %1142 = vmatprep.subr.mxu0 0.0
    %1143 = vmatpush1.xpose.msra.mxu0 0.0
    %1144 = vmatprep.subr.mxu0 0.0
    %1145 = vmatpush1.xpose.msra.mxu0 0.0
    %1146 = vmatprep.subr.mxu0 0.0
    %1147 = vmatpush1.xpose.msra.mxu0 0.0
    %1148 = vmatprep.subr.mxu0 0.0
    %1149 = vmatpush1.xpose.msra.mxu0 0.0
    %1150 = vmatprep.subr.mxu0 0.0
    %1151 = vmatpush1.xpose.msra.mxu0 0.0
    %1152 = vmatprep.subr.mxu0 0.0
    %1153 = vmatpush1.xpose.msra.mxu0 %v1126
    %1154 = vmatprep.subr.mxu0 0.0
    %1155 = vmatpush1.xpose.msra.mxu0 %v1123
    %1156 = vmatprep.subr.mxu0 0.0
    %1157 = vmatpush1.xpose.msra.mxu0 %v1120
    %1158 = vmatprep.subr.mxu0 0.0
    %1159 = vmatpush1.xpose.msra.mxu0 %v1117
    %1160 = vmatprep.subr.mxu0 0.0
    %1161 = vmatpush2.xpose.msra.mxu0 0.0
    %1162 = vmatprep.subr.mxu0 0.0
    %1163 = vmatpush2.xpose.msra.mxu0 0.0
    %1164 = vmatprep.subr.mxu0 0.0
    %1165 = vmatpush2.xpose.msra.mxu0 0.0
    %1166 = vmatprep.subr.mxu0 0.0
    %1167 = vmatpush2.xpose.msra.mxu0 0.0
    %1168 = vmatprep.subr.mxu0 0.0
    %1169 = vmatpush2.xpose.msra.mxu0 0.0
    %1170 = vmatprep.subr.mxu0 0.0
    %1171 = vmatpush2.xpose.msra.mxu0 0.0
    %1172 = vmatprep.subr.mxu0 0.0
    %1173 = vmatpush2.xpose.msra.mxu0 0.0
    %1174 = vmatprep.subr.mxu0 0.0
    %1175 = vmatpush2.xpose.msra.mxu0 0.0
    %1176 = vmatprep.subr.mxu0 0.0
    %1177 = vmatpush2.xpose.msra.mxu0 0.0
    %1178 = vmatprep.subr.mxu0 0.0
    %1179 = vmatpush2.xpose.msra.mxu0 0.0
    %1180 = vmatprep.subr.mxu0 0.0
    %1181 = vmatpush2.xpose.msra.mxu0 0.0
    %1182 = vmatprep.subr.mxu0 0.0
    %1183 = vmatpush2.xpose.msra.mxu0 0.0
    %1184 = vmatprep.subr.mxu0 0.0
    %1185 = vmatpush2.xpose.msra.mxu0 0.0
    %1186 = vmatprep.subr.mxu0 0.0
    %1187 = vmatpush2.xpose.msra.mxu0 0.0
    %1188 = vmatprep.subr.mxu0 0.0
    %1189 = vmatpush2.xpose.msra.mxu0 0.0
    %1190 = vmatprep.subr.mxu0 0.0
    %1191 = vmatpush2.xpose.msra.mxu0 0.0
    %1192 = vmatprep.mubr.f32.mxu0 0.0
    %1193 = vmatmul.mubr.f32.gmra.mxu0 %v1117
    %v1194 = vpop.f32.mrf.mxu0
    %v1195 = vadd.f32 0.0, %v1194
    %v1196 = vpop.f32.mrf.mxu0
    %1197 = vmatprep.mubr.f32.mxu0 0.0
    %1198 = vmatmul.mubr.f32.gmra.mxu0 %v1120
    %v1199 = vpop.f32.mrf.mxu0
    %v1200 = vadd.f32 0.0, %v1199
    %v1201 = vpop.f32.mrf.mxu0
    %1202 = vmatprep.mubr.f32.mxu0 0.0
    %1203 = vmatmul.mubr.f32.gmra.mxu0 %v1123
    %v1204 = vpop.f32.mrf.mxu0
    %v1205 = vadd.f32 0.0, %v1204
    %v1206 = vpop.f32.mrf.mxu0
    %1207 = vmatprep.mubr.f32.mxu0 0.0
    %1208 = vmatmul.mubr.f32.gmra.mxu0 %v1126
    %v1209 = vpop.f32.mrf.mxu0
    %v1210 = vadd.f32 0.0, %v1209
    %v1211 = vpop.f32.mrf.mxu0
    %1212 = vdwg.mxu0
    %v1214 = vsel %vm145, %v87, 0
    %v1217 = vsel %vm145, %v88, 0
    %v1220 = vsel %vm145, %v89, 0
    %v1223 = vsel %vm145, %v90, 0
    %1225 = vmatprep.subr.mxu0 0.0
    %1226 = vmatpush1.xpose.msra.mxu0 0.0
    %1227 = vmatprep.subr.mxu0 0.0
    %1228 = vmatpush1.xpose.msra.mxu0 0.0
    %1229 = vmatprep.subr.mxu0 0.0
    %1230 = vmatpush1.xpose.msra.mxu0 0.0
    %1231 = vmatprep.subr.mxu0 0.0
    %1232 = vmatpush1.xpose.msra.mxu0 0.0
    %1233 = vmatprep.subr.mxu0 0.0
    %1234 = vmatpush1.xpose.msra.mxu0 0.0
    %1235 = vmatprep.subr.mxu0 0.0
    %1236 = vmatpush1.xpose.msra.mxu0 0.0
    %1237 = vmatprep.subr.mxu0 0.0
    %1238 = vmatpush1.xpose.msra.mxu0 0.0
    %1239 = vmatprep.subr.mxu0 0.0
    %1240 = vmatpush1.xpose.msra.mxu0 0.0
    %1241 = vmatprep.subr.mxu0 0.0
    %1242 = vmatpush1.xpose.msra.mxu0 0.0
    %1243 = vmatprep.subr.mxu0 0.0
    %1244 = vmatpush1.xpose.msra.mxu0 0.0
    %1245 = vmatprep.subr.mxu0 0.0
    %1246 = vmatpush1.xpose.msra.mxu0 0.0
    %1247 = vmatprep.subr.mxu0 0.0
    %1248 = vmatpush1.xpose.msra.mxu0 0.0
    %1249 = vmatprep.subr.mxu0 0.0
    %1250 = vmatpush1.xpose.msra.mxu0 %v1223
    %1251 = vmatprep.subr.mxu0 0.0
    %1252 = vmatpush1.xpose.msra.mxu0 %v1220
    %1253 = vmatprep.subr.mxu0 0.0
    %1254 = vmatpush1.xpose.msra.mxu0 %v1217
    %1255 = vmatprep.subr.mxu0 0.0
    %1256 = vmatpush1.xpose.msra.mxu0 %v1214
    %1257 = vmatprep.subr.mxu0 0.0
    %1258 = vmatpush2.xpose.msra.mxu0 0.0
    %1259 = vmatprep.subr.mxu0 0.0
    %1260 = vmatpush2.xpose.msra.mxu0 0.0
    %1261 = vmatprep.subr.mxu0 0.0
    %1262 = vmatpush2.xpose.msra.mxu0 0.0
    %1263 = vmatprep.subr.mxu0 0.0
    %1264 = vmatpush2.xpose.msra.mxu0 0.0
    %1265 = vmatprep.subr.mxu0 0.0
    %1266 = vmatpush2.xpose.msra.mxu0 0.0
    %1267 = vmatprep.subr.mxu0 0.0
    %1268 = vmatpush2.xpose.msra.mxu0 0.0
    %1269 = vmatprep.subr.mxu0 0.0
    %1270 = vmatpush2.xpose.msra.mxu0 0.0
    %1271 = vmatprep.subr.mxu0 0.0
    %1272 = vmatpush2.xpose.msra.mxu0 0.0
    %1273 = vmatprep.subr.mxu0 0.0
    %1274 = vmatpush2.xpose.msra.mxu0 0.0
    %1275 = vmatprep.subr.mxu0 0.0
    %1276 = vmatpush2.xpose.msra.mxu0 0.0
    %1277 = vmatprep.subr.mxu0 0.0
    %1278 = vmatpush2.xpose.msra.mxu0 0.0
    %1279 = vmatprep.subr.mxu0 0.0
    %1280 = vmatpush2.xpose.msra.mxu0 0.0
    %1281 = vmatprep.subr.mxu0 0.0
    %1282 = vmatpush2.xpose.msra.mxu0 0.0
    %1283 = vmatprep.subr.mxu0 0.0
    %1284 = vmatpush2.xpose.msra.mxu0 0.0
    %1285 = vmatprep.subr.mxu0 0.0
    %1286 = vmatpush2.xpose.msra.mxu0 0.0
    %1287 = vmatprep.subr.mxu0 0.0
    %1288 = vmatpush2.xpose.msra.mxu0 0.0
    %1289 = vmatprep.mubr.f32.mxu0 0.0
    %1290 = vmatmul.mubr.f32.gmra.mxu0 %v1214
    %v1291 = vpop.f32.mrf.mxu0
    %v1292 = vadd.f32 0.0, %v1291
    %v1293 = vpop.f32.mrf.mxu0
    %1294 = vmatprep.mubr.f32.mxu0 0.0
    %1295 = vmatmul.mubr.f32.gmra.mxu0 %v1217
    %v1296 = vpop.f32.mrf.mxu0
    %v1297 = vadd.f32 0.0, %v1296
    %v1298 = vpop.f32.mrf.mxu0
    %1299 = vmatprep.mubr.f32.mxu0 0.0
    %1300 = vmatmul.mubr.f32.gmra.mxu0 %v1220
    %v1301 = vpop.f32.mrf.mxu0
    %v1302 = vadd.f32 0.0, %v1301
    %v1303 = vpop.f32.mrf.mxu0
    %1304 = vmatprep.mubr.f32.mxu0 0.0
    %1305 = vmatmul.mubr.f32.gmra.mxu0 %v1223
    %v1306 = vpop.f32.mrf.mxu0
    %v1307 = vadd.f32 0.0, %v1306
    %v1308 = vpop.f32.mrf.mxu0
    %1309 = vdwg.mxu0
    %v1311 = vsel %vm145, %v91, 0
    %v1314 = vsel %vm145, %v92, 0
    %v1317 = vsel %vm145, %v93, 0
    %v1320 = vsel %vm145, %v94, 0
    %1322 = vmatprep.subr.mxu0 0.0
    %1323 = vmatpush1.xpose.msra.mxu0 0.0
    %1324 = vmatprep.subr.mxu0 0.0
    %1325 = vmatpush1.xpose.msra.mxu0 0.0
    %1326 = vmatprep.subr.mxu0 0.0
    %1327 = vmatpush1.xpose.msra.mxu0 0.0
    %1328 = vmatprep.subr.mxu0 0.0
    %1329 = vmatpush1.xpose.msra.mxu0 0.0
    %1330 = vmatprep.subr.mxu0 0.0
    %1331 = vmatpush1.xpose.msra.mxu0 0.0
    %1332 = vmatprep.subr.mxu0 0.0
    %1333 = vmatpush1.xpose.msra.mxu0 0.0
    %1334 = vmatprep.subr.mxu0 0.0
    %1335 = vmatpush1.xpose.msra.mxu0 0.0
    %1336 = vmatprep.subr.mxu0 0.0
    %1337 = vmatpush1.xpose.msra.mxu0 0.0
    %1338 = vmatprep.subr.mxu0 0.0
    %1339 = vmatpush1.xpose.msra.mxu0 0.0
    %1340 = vmatprep.subr.mxu0 0.0
    %1341 = vmatpush1.xpose.msra.mxu0 0.0
    %1342 = vmatprep.subr.mxu0 0.0
    %1343 = vmatpush1.xpose.msra.mxu0 0.0
    %1344 = vmatprep.subr.mxu0 0.0
    %1345 = vmatpush1.xpose.msra.mxu0 0.0
    %1346 = vmatprep.subr.mxu0 0.0
    %1347 = vmatpush1.xpose.msra.mxu0 %v1320
    %1348 = vmatprep.subr.mxu0 0.0
    %1349 = vmatpush1.xpose.msra.mxu0 %v1317
    %1350 = vmatprep.subr.mxu0 0.0
    %1351 = vmatpush1.xpose.msra.mxu0 %v1314
    %1352 = vmatprep.subr.mxu0 0.0
    %1353 = vmatpush1.xpose.msra.mxu0 %v1311
    %1354 = vmatprep.subr.mxu0 0.0
    %1355 = vmatpush2.xpose.msra.mxu0 0.0
    %1356 = vmatprep.subr.mxu0 0.0
    %1357 = vmatpush2.xpose.msra.mxu0 0.0
    %1358 = vmatprep.subr.mxu0 0.0
    %1359 = vmatpush2.xpose.msra.mxu0 0.0
    %1360 = vmatprep.subr.mxu0 0.0
    %1361 = vmatpush2.xpose.msra.mxu0 0.0
    %1362 = vmatprep.subr.mxu0 0.0
    %1363 = vmatpush2.xpose.msra.mxu0 0.0
    %1364 = vmatprep.subr.mxu0 0.0
    %1365 = vmatpush2.xpose.msra.mxu0 0.0
    %1366 = vmatprep.subr.mxu0 0.0
    %1367 = vmatpush2.xpose.msra.mxu0 0.0
    %1368 = vmatprep.subr.mxu0 0.0
    %1369 = vmatpush2.xpose.msra.mxu0 0.0
    %1370 = vmatprep.subr.mxu0 0.0
    %1371 = vmatpush2.xpose.msra.mxu0 0.0
    %1372 = vmatprep.subr.mxu0 0.0
    %1373 = vmatpush2.xpose.msra.mxu0 0.0
    %1374 = vmatprep.subr.mxu0 0.0
    %1375 = vmatpush2.xpose.msra.mxu0 0.0
    %1376 = vmatprep.subr.mxu0 0.0
    %1377 = vmatpush2.xpose.msra.mxu0 0.0
    %1378 = vmatprep.subr.mxu0 0.0
    %1379 = vmatpush2.xpose.msra.mxu0 0.0
    %1380 = vmatprep.subr.mxu0 0.0
    %1381 = vmatpush2.xpose.msra.mxu0 0.0
    %1382 = vmatprep.subr.mxu0 0.0
    %1383 = vmatpush2.xpose.msra.mxu0 0.0
    %1384 = vmatprep.subr.mxu0 0.0
    %1385 = vmatpush2.xpose.msra.mxu0 0.0
    %1386 = vmatprep.mubr.f32.mxu0 0.0
    %1387 = vmatmul.mubr.f32.gmra.mxu0 %v1311
    %v1388 = vpop.f32.mrf.mxu0
    %v1389 = vadd.f32 0.0, %v1388
    %v1390 = vpop.f32.mrf.mxu0
    %1391 = vmatprep.mubr.f32.mxu0 0.0
    %1392 = vmatmul.mubr.f32.gmra.mxu0 %v1314
    %v1393 = vpop.f32.mrf.mxu0
    %v1394 = vadd.f32 0.0, %v1393
    %v1395 = vpop.f32.mrf.mxu0
    %1396 = vmatprep.mubr.f32.mxu0 0.0
    %1397 = vmatmul.mubr.f32.gmra.mxu0 %v1317
    %v1398 = vpop.f32.mrf.mxu0
    %v1399 = vadd.f32 0.0, %v1398
    %v1400 = vpop.f32.mrf.mxu0
    %1401 = vmatprep.mubr.f32.mxu0 0.0
    %1402 = vmatmul.mubr.f32.gmra.mxu0 %v1320
    %v1403 = vpop.f32.mrf.mxu0
    %v1404 = vadd.f32 0.0, %v1403
    %v1405 = vpop.f32.mrf.mxu0
    %1406 = vdwg.mxu0
    %v1408 = vsel %vm145, %v95, 0
    %v1411 = vsel %vm145, %v96, 0
    %v1414 = vsel %vm145, %v97, 0
    %v1417 = vsel %vm145, %v98, 0
    %1419 = vmatprep.subr.mxu0 0.0
    %1420 = vmatpush1.xpose.msra.mxu0 0.0
    %1421 = vmatprep.subr.mxu0 0.0
    %1422 = vmatpush1.xpose.msra.mxu0 0.0
    %1423 = vmatprep.subr.mxu0 0.0
    %1424 = vmatpush1.xpose.msra.mxu0 0.0
    %1425 = vmatprep.subr.mxu0 0.0
    %1426 = vmatpush1.xpose.msra.mxu0 0.0
    %1427 = vmatprep.subr.mxu0 0.0
    %1428 = vmatpush1.xpose.msra.mxu0 0.0
    %1429 = vmatprep.subr.mxu0 0.0
    %1430 = vmatpush1.xpose.msra.mxu0 0.0
    %1431 = vmatprep.subr.mxu0 0.0
    %1432 = vmatpush1.xpose.msra.mxu0 0.0
    %1433 = vmatprep.subr.mxu0 0.0
    %1434 = vmatpush1.xpose.msra.mxu0 0.0
    %1435 = vmatprep.subr.mxu0 0.0
    %1436 = vmatpush1.xpose.msra.mxu0 0.0
    %1437 = vmatprep.subr.mxu0 0.0
    %1438 = vmatpush1.xpose.msra.mxu0 0.0
    %1439 = vmatprep.subr.mxu0 0.0
    %1440 = vmatpush1.xpose.msra.mxu0 0.0
    %1441 = vmatprep.subr.mxu0 0.0
    %1442 = vmatpush1.xpose.msra.mxu0 0.0
    %1443 = vmatprep.subr.mxu0 0.0
    %1444 = vmatpush1.xpose.msra.mxu0 %v1417
    %1445 = vmatprep.subr.mxu0 0.0
    %1446 = vmatpush1.xpose.msra.mxu0 %v1414
    %1447 = vmatprep.subr.mxu0 0.0
    %1448 = vmatpush1.xpose.msra.mxu0 %v1411
    %1449 = vmatprep.subr.mxu0 0.0
    %1450 = vmatpush1.xpose.msra.mxu0 %v1408
    %1451 = vmatprep.subr.mxu0 0.0
    %1452 = vmatpush2.xpose.msra.mxu0 0.0
    %1453 = vmatprep.subr.mxu0 0.0
    %1454 = vmatpush2.xpose.msra.mxu0 0.0
    %1455 = vmatprep.subr.mxu0 0.0
    %1456 = vmatpush2.xpose.msra.mxu0 0.0
    %1457 = vmatprep.subr.mxu0 0.0
    %1458 = vmatpush2.xpose.msra.mxu0 0.0
    %1459 = vmatprep.subr.mxu0 0.0
    %1460 = vmatpush2.xpose.msra.mxu0 0.0
    %1461 = vmatprep.subr.mxu0 0.0
    %1462 = vmatpush2.xpose.msra.mxu0 0.0
    %1463 = vmatprep.subr.mxu0 0.0
    %1464 = vmatpush2.xpose.msra.mxu0 0.0
    %1465 = vmatprep.subr.mxu0 0.0
    %1466 = vmatpush2.xpose.msra.mxu0 0.0
    %1467 = vmatprep.subr.mxu0 0.0
    %1468 = vmatpush2.xpose.msra.mxu0 0.0
    %1469 = vmatprep.subr.mxu0 0.0
    %1470 = vmatpush2.xpose.msra.mxu0 0.0
    %1471 = vmatprep.subr.mxu0 0.0
    %1472 = vmatpush2.xpose.msra.mxu0 0.0
    %1473 = vmatprep.subr.mxu0 0.0
    %1474 = vmatpush2.xpose.msra.mxu0 0.0
    %1475 = vmatprep.subr.mxu0 0.0
    %1476 = vmatpush2.xpose.msra.mxu0 0.0
    %1477 = vmatprep.subr.mxu0 0.0
    %1478 = vmatpush2.xpose.msra.mxu0 0.0
    %1479 = vmatprep.subr.mxu0 0.0
    %1480 = vmatpush2.xpose.msra.mxu0 0.0
    %1481 = vmatprep.subr.mxu0 0.0
    %1482 = vmatpush2.xpose.msra.mxu0 0.0
    %1483 = vmatprep.mubr.f32.mxu0 0.0
    %1484 = vmatmul.mubr.f32.gmra.mxu0 %v1408
    %v1485 = vpop.f32.mrf.mxu0
    %v1486 = vadd.f32 0.0, %v1485
    %v1487 = vpop.f32.mrf.mxu0
    %1488 = vmatprep.mubr.f32.mxu0 0.0
    %1489 = vmatmul.mubr.f32.gmra.mxu0 %v1411
    %v1490 = vpop.f32.mrf.mxu0
    %v1491 = vadd.f32 0.0, %v1490
    %v1492 = vpop.f32.mrf.mxu0
    %1493 = vmatprep.mubr.f32.mxu0 0.0
    %1494 = vmatmul.mubr.f32.gmra.mxu0 %v1414
    %v1495 = vpop.f32.mrf.mxu0
    %v1496 = vadd.f32 0.0, %v1495
    %v1497 = vpop.f32.mrf.mxu0
    %1498 = vmatprep.mubr.f32.mxu0 0.0
    %1499 = vmatmul.mubr.f32.gmra.mxu0 %v1417
    %v1500 = vpop.f32.mrf.mxu0
    %v1501 = vadd.f32 0.0, %v1500
    %v1502 = vpop.f32.mrf.mxu0
    %1503 = vdwg.mxu0
    %v1505 = vsel %vm145, %v99, 0
    %v1508 = vsel %vm145, %v100, 0
    %v1511 = vsel %vm145, %v101, 0
    %v1514 = vsel %vm145, %v102, 0
    %1516 = vmatprep.subr.mxu0 0.0
    %1517 = vmatpush1.xpose.msra.mxu0 0.0
    %1518 = vmatprep.subr.mxu0 0.0
    %1519 = vmatpush1.xpose.msra.mxu0 0.0
    %1520 = vmatprep.subr.mxu0 0.0
    %1521 = vmatpush1.xpose.msra.mxu0 0.0
    %1522 = vmatprep.subr.mxu0 0.0
    %1523 = vmatpush1.xpose.msra.mxu0 0.0
    %1524 = vmatprep.subr.mxu0 0.0
    %1525 = vmatpush1.xpose.msra.mxu0 0.0
    %1526 = vmatprep.subr.mxu0 0.0
    %1527 = vmatpush1.xpose.msra.mxu0 0.0
    %1528 = vmatprep.subr.mxu0 0.0
    %1529 = vmatpush1.xpose.msra.mxu0 0.0
    %1530 = vmatprep.subr.mxu0 0.0
    %1531 = vmatpush1.xpose.msra.mxu0 0.0
    %1532 = vmatprep.subr.mxu0 0.0
    %1533 = vmatpush1.xpose.msra.mxu0 0.0
    %1534 = vmatprep.subr.mxu0 0.0
    %1535 = vmatpush1.xpose.msra.mxu0 0.0
    %1536 = vmatprep.subr.mxu0 0.0
    %1537 = vmatpush1.xpose.msra.mxu0 0.0
    %1538 = vmatprep.subr.mxu0 0.0
    %1539 = vmatpush1.xpose.msra.mxu0 0.0
    %1540 = vmatprep.subr.mxu0 0.0
    %1541 = vmatpush1.xpose.msra.mxu0 %v1514
    %1542 = vmatprep.subr.mxu0 0.0
    %1543 = vmatpush1.xpose.msra.mxu0 %v1511
    %1544 = vmatprep.subr.mxu0 0.0
    %1545 = vmatpush1.xpose.msra.mxu0 %v1508
    %1546 = vmatprep.subr.mxu0 0.0
    %1547 = vmatpush1.xpose.msra.mxu0 %v1505
    %1548 = vmatprep.subr.mxu0 0.0
    %1549 = vmatpush2.xpose.msra.mxu0 0.0
    %1550 = vmatprep.subr.mxu0 0.0
    %1551 = vmatpush2.xpose.msra.mxu0 0.0
    %1552 = vmatprep.subr.mxu0 0.0
    %1553 = vmatpush2.xpose.msra.mxu0 0.0
    %1554 = vmatprep.subr.mxu0 0.0
    %1555 = vmatpush2.xpose.msra.mxu0 0.0
    %1556 = vmatprep.subr.mxu0 0.0
    %1557 = vmatpush2.xpose.msra.mxu0 0.0
    %1558 = vmatprep.subr.mxu0 0.0
    %1559 = vmatpush2.xpose.msra.mxu0 0.0
    %1560 = vmatprep.subr.mxu0 0.0
    %1561 = vmatpush2.xpose.msra.mxu0 0.0
    %1562 = vmatprep.subr.mxu0 0.0
    %1563 = vmatpush2.xpose.msra.mxu0 0.0
    %1564 = vmatprep.subr.mxu0 0.0
    %1565 = vmatpush2.xpose.msra.mxu0 0.0
    %1566 = vmatprep.subr.mxu0 0.0
    %1567 = vmatpush2.xpose.msra.mxu0 0.0
    %1568 = vmatprep.subr.mxu0 0.0
    %1569 = vmatpush2.xpose.msra.mxu0 0.0
    %1570 = vmatprep.subr.mxu0 0.0
    %1571 = vmatpush2.xpose.msra.mxu0 0.0
    %1572 = vmatprep.subr.mxu0 0.0
    %1573 = vmatpush2.xpose.msra.mxu0 0.0
    %1574 = vmatprep.subr.mxu0 0.0
    %1575 = vmatpush2.xpose.msra.mxu0 0.0
    %1576 = vmatprep.subr.mxu0 0.0
    %1577 = vmatpush2.xpose.msra.mxu0 0.0
    %1578 = vmatprep.subr.mxu0 0.0
    %1579 = vmatpush2.xpose.msra.mxu0 0.0
    %1580 = vmatprep.mubr.f32.mxu0 0.0
    %1581 = vmatmul.mubr.f32.gmra.mxu0 %v1505
    %v1582 = vpop.f32.mrf.mxu0
    %v1583 = vadd.f32 0.0, %v1582
    %v1584 = vpop.f32.mrf.mxu0
    %1585 = vmatprep.mubr.f32.mxu0 0.0
    %1586 = vmatmul.mubr.f32.gmra.mxu0 %v1508
    %v1587 = vpop.f32.mrf.mxu0
    %v1588 = vadd.f32 0.0, %v1587
    %v1589 = vpop.f32.mrf.mxu0
    %1590 = vmatprep.mubr.f32.mxu0 0.0
    %1591 = vmatmul.mubr.f32.gmra.mxu0 %v1511
    %v1592 = vpop.f32.mrf.mxu0
    %v1593 = vadd.f32 0.0, %v1592
    %v1594 = vpop.f32.mrf.mxu0
    %1595 = vmatprep.mubr.f32.mxu0 0.0
    %1596 = vmatmul.mubr.f32.gmra.mxu0 %v1514
    %v1597 = vpop.f32.mrf.mxu0
    %v1598 = vadd.f32 0.0, %v1597
    %v1599 = vpop.f32.mrf.mxu0
    %1600 = vdwg.mxu0
    %v1602 = vsel %vm145, %v103, 0
    %v1605 = vsel %vm145, %v104, 0
    %v1608 = vsel %vm145, %v105, 0
    %v1611 = vsel %vm145, %v106, 0
    %1613 = vmatprep.subr.mxu0 0.0
    %1614 = vmatpush1.xpose.msra.mxu0 0.0
    %1615 = vmatprep.subr.mxu0 0.0
    %1616 = vmatpush1.xpose.msra.mxu0 0.0
    %1617 = vmatprep.subr.mxu0 0.0
    %1618 = vmatpush1.xpose.msra.mxu0 0.0
    %1619 = vmatprep.subr.mxu0 0.0
    %1620 = vmatpush1.xpose.msra.mxu0 0.0
    %1621 = vmatprep.subr.mxu0 0.0
    %1622 = vmatpush1.xpose.msra.mxu0 0.0
    %1623 = vmatprep.subr.mxu0 0.0
    %1624 = vmatpush1.xpose.msra.mxu0 0.0
    %1625 = vmatprep.subr.mxu0 0.0
    %1626 = vmatpush1.xpose.msra.mxu0 0.0
    %1627 = vmatprep.subr.mxu0 0.0
    %1628 = vmatpush1.xpose.msra.mxu0 0.0
    %1629 = vmatprep.subr.mxu0 0.0
    %1630 = vmatpush1.xpose.msra.mxu0 0.0
    %1631 = vmatprep.subr.mxu0 0.0
    %1632 = vmatpush1.xpose.msra.mxu0 0.0
    %1633 = vmatprep.subr.mxu0 0.0
    %1634 = vmatpush1.xpose.msra.mxu0 0.0
    %1635 = vmatprep.subr.mxu0 0.0
    %1636 = vmatpush1.xpose.msra.mxu0 0.0
    %1637 = vmatprep.subr.mxu0 0.0
    %1638 = vmatpush1.xpose.msra.mxu0 %v1611
    %1639 = vmatprep.subr.mxu0 0.0
    %1640 = vmatpush1.xpose.msra.mxu0 %v1608
    %1641 = vmatprep.subr.mxu0 0.0
    %1642 = vmatpush1.xpose.msra.mxu0 %v1605
    %1643 = vmatprep.subr.mxu0 0.0
    %1644 = vmatpush1.xpose.msra.mxu0 %v1602
    %1645 = vmatprep.subr.mxu0 0.0
    %1646 = vmatpush2.xpose.msra.mxu0 0.0
    %1647 = vmatprep.subr.mxu0 0.0
    %1648 = vmatpush2.xpose.msra.mxu0 0.0
    %1649 = vmatprep.subr.mxu0 0.0
    %1650 = vmatpush2.xpose.msra.mxu0 0.0
    %1651 = vmatprep.subr.mxu0 0.0
    %1652 = vmatpush2.xpose.msra.mxu0 0.0
    %1653 = vmatprep.subr.mxu0 0.0
    %1654 = vmatpush2.xpose.msra.mxu0 0.0
    %1655 = vmatprep.subr.mxu0 0.0
    %1656 = vmatpush2.xpose.msra.mxu0 0.0
    %1657 = vmatprep.subr.mxu0 0.0
    %1658 = vmatpush2.xpose.msra.mxu0 0.0
    %1659 = vmatprep.subr.mxu0 0.0
    %1660 = vmatpush2.xpose.msra.mxu0 0.0
    %1661 = vmatprep.subr.mxu0 0.0
    %1662 = vmatpush2.xpose.msra.mxu0 0.0
    %1663 = vmatprep.subr.mxu0 0.0
    %1664 = vmatpush2.xpose.msra.mxu0 0.0
    %1665 = vmatprep.subr.mxu0 0.0
    %1666 = vmatpush2.xpose.msra.mxu0 0.0
    %1667 = vmatprep.subr.mxu0 0.0
    %1668 = vmatpush2.xpose.msra.mxu0 0.0
    %1669 = vmatprep.subr.mxu0 0.0
    %1670 = vmatpush2.xpose.msra.mxu0 0.0
    %1671 = vmatprep.subr.mxu0 0.0
    %1672 = vmatpush2.xpose.msra.mxu0 0.0
    %1673 = vmatprep.subr.mxu0 0.0
    %1674 = vmatpush2.xpose.msra.mxu0 0.0
    %1675 = vmatprep.subr.mxu0 0.0
    %1676 = vmatpush2.xpose.msra.mxu0 0.0
    %1677 = vmatprep.mubr.f32.mxu0 0.0
    %1678 = vmatmul.mubr.f32.gmra.mxu0 %v1602
    %v1679 = vpop.f32.mrf.mxu0
    %v1680 = vadd.f32 0.0, %v1679
    %v1681 = vpop.f32.mrf.mxu0
    %1682 = vmatprep.mubr.f32.mxu0 0.0
    %1683 = vmatmul.mubr.f32.gmra.mxu0 %v1605
    %v1684 = vpop.f32.mrf.mxu0
    %v1685 = vadd.f32 0.0, %v1684
    %v1686 = vpop.f32.mrf.mxu0
    %1687 = vmatprep.mubr.f32.mxu0 0.0
    %1688 = vmatmul.mubr.f32.gmra.mxu0 %v1608
    %v1689 = vpop.f32.mrf.mxu0
    %v1690 = vadd.f32 0.0, %v1689
    %v1691 = vpop.f32.mrf.mxu0
    %1692 = vmatprep.mubr.f32.mxu0 0.0
    %1693 = vmatmul.mubr.f32.gmra.mxu0 %v1611
    %v1694 = vpop.f32.mrf.mxu0
    %v1695 = vadd.f32 0.0, %v1694
    %v1696 = vpop.f32.mrf.mxu0
    %1697 = vdwg.mxu0
    %v1698 = vadd.s32 %v109, 16
    %v1699 = vadd.s32 %v109, 24
    %vm1700 = vcmp.eq.s32.totalorder %v109, %v117
    %vm1701 = vcmp.eq.s32.totalorder %v110, %v117
    %vm1702 = vcmp.eq.s32.totalorder %v1698, %v117
    %vm1703 = vcmp.eq.s32.totalorder %v1699, %v117
    %v1704 = vsel %vm1700, 1, 0
    %v1705 = vsel %vm1701, 1, 0
    %v1706 = vsel %vm1702, 1, 0
    %v1707 = vsel %vm1703, 1, 0
    %v1708 = vcvt.s32.f32 %v1704
    %v1709 = vcvt.s32.f32 %v1705
    %v1710 = vcvt.s32.f32 %v1706
    %v1711 = vcvt.s32.f32 %v1707
    %v1712 = vsub.f32 %v225, %v1708
    %v1713 = vsub.f32 %v230, %v1709
    %v1714 = vsub.f32 %v235, %v1710
    %v1715 = vsub.f32 %v240, %v1711
    %v1716 = vsub.f32 %v322, %v1708
    %v1717 = vsub.f32 %v327, %v1709
    %v1718 = vsub.f32 %v332, %v1710
    %v1719 = vsub.f32 %v337, %v1711
    %v1720 = vsub.f32 %v419, %v1708
    %v1721 = vsub.f32 %v424, %v1709
    %v1722 = vsub.f32 %v429, %v1710
    %v1723 = vsub.f32 %v434, %v1711
    %v1724 = vsub.f32 %v516, %v1708
    %v1725 = vsub.f32 %v521, %v1709
    %v1726 = vsub.f32 %v526, %v1710
    %v1727 = vsub.f32 %v531, %v1711
    %v1728 = vsub.f32 %v613, %v1708
    %v1729 = vsub.f32 %v618, %v1709
    %v1730 = vsub.f32 %v623, %v1710
    %v1731 = vsub.f32 %v628, %v1711
    %v1732 = vsub.f32 %v710, %v1708
    %v1733 = vsub.f32 %v715, %v1709
    %v1734 = vsub.f32 %v720, %v1710
    %v1735 = vsub.f32 %v725, %v1711
    %v1736 = vsub.f32 %v807, %v1708
    %v1737 = vsub.f32 %v812, %v1709
    %v1738 = vsub.f32 %v817, %v1710
    %v1739 = vsub.f32 %v822, %v1711
    %v1740 = vsub.f32 %v904, %v1708
    %v1741 = vsub.f32 %v909, %v1709
    %v1742 = vsub.f32 %v914, %v1710
    %v1743 = vsub.f32 %v919, %v1711
    %v1744 = vsub.f32 %v1001, %v1708
    %v1745 = vsub.f32 %v1006, %v1709
    %v1746 = vsub.f32 %v1011, %v1710
    %v1747 = vsub.f32 %v1016, %v1711
    %v1748 = vsub.f32 %v1098, %v1708
    %v1749 = vsub.f32 %v1103, %v1709
    %v1750 = vsub.f32 %v1108, %v1710
    %v1751 = vsub.f32 %v1113, %v1711
    %v1752 = vsub.f32 %v1195, %v1708
    %v1753 = vsub.f32 %v1200, %v1709
    %v1754 = vsub.f32 %v1205, %v1710
    %v1755 = vsub.f32 %v1210, %v1711
    %v1756 = vsub.f32 %v1292, %v1708
    %v1757 = vsub.f32 %v1297, %v1709
    %v1758 = vsub.f32 %v1302, %v1710
    %v1759 = vsub.f32 %v1307, %v1711
    %v1760 = vsub.f32 %v1389, %v1708
    %v1761 = vsub.f32 %v1394, %v1709
    %v1762 = vsub.f32 %v1399, %v1710
    %v1763 = vsub.f32 %v1404, %v1711
    %v1764 = vsub.f32 %v1486, %v1708
    %v1765 = vsub.f32 %v1491, %v1709
    %v1766 = vsub.f32 %v1496, %v1710
    %v1767 = vsub.f32 %v1501, %v1711
    %v1768 = vsub.f32 %v1583, %v1708
    %v1769 = vsub.f32 %v1588, %v1709
    %v1770 = vsub.f32 %v1593, %v1710
    %v1771 = vsub.f32 %v1598, %v1711
    %v1772 = vsub.f32 %v1680, %v1708
    %v1773 = vsub.f32 %v1685, %v1709
    %v1774 = vsub.f32 %v1690, %v1710
    %v1775 = vsub.f32 %v1695, %v1711
    %v1776 = vmul.f32 %v1712, %v1712
    %v1777 = vmul.f32 %v1713, %v1713
    %v1778 = vmul.f32 %v1714, %v1714
    %v1779 = vmul.f32 %v1715, %v1715
    %v1780 = vmul.f32 %v1716, %v1716
    %v1781 = vmul.f32 %v1717, %v1717
    %v1782 = vmul.f32 %v1718, %v1718
    %v1783 = vmul.f32 %v1719, %v1719
    %v1784 = vmul.f32 %v1720, %v1720
    %v1785 = vmul.f32 %v1721, %v1721
    %v1786 = vmul.f32 %v1722, %v1722
    %v1787 = vmul.f32 %v1723, %v1723
    %v1788 = vmul.f32 %v1724, %v1724
    %v1789 = vmul.f32 %v1725, %v1725
    %v1790 = vmul.f32 %v1726, %v1726
    %v1791 = vmul.f32 %v1727, %v1727
    %v1792 = vmul.f32 %v1728, %v1728
    %v1793 = vmul.f32 %v1729, %v1729
    %v1794 = vmul.f32 %v1730, %v1730
    %v1795 = vmul.f32 %v1731, %v1731
    %v1796 = vmul.f32 %v1732, %v1732
    %v1797 = vmul.f32 %v1733, %v1733
    %v1798 = vmul.f32 %v1734, %v1734
    %v1799 = vmul.f32 %v1735, %v1735
    %v1800 = vmul.f32 %v1736, %v1736
    %v1801 = vmul.f32 %v1737, %v1737
    %v1802 = vmul.f32 %v1738, %v1738
    %v1803 = vmul.f32 %v1739, %v1739
    %v1804 = vmul.f32 %v1740, %v1740
    %v1805 = vmul.f32 %v1741, %v1741
    %v1806 = vmul.f32 %v1742, %v1742
    %v1807 = vmul.f32 %v1743, %v1743
    %v1808 = vmul.f32 %v1744, %v1744
    %v1809 = vmul.f32 %v1745, %v1745
    %v1810 = vmul.f32 %v1746, %v1746
    %v1811 = vmul.f32 %v1747, %v1747
    %v1812 = vmul.f32 %v1748, %v1748
    %v1813 = vmul.f32 %v1749, %v1749
    %v1814 = vmul.f32 %v1750, %v1750
    %v1815 = vmul.f32 %v1751, %v1751
    %v1816 = vmul.f32 %v1752, %v1752
    %v1817 = vmul.f32 %v1753, %v1753
    %v1818 = vmul.f32 %v1754, %v1754
    %v1819 = vmul.f32 %v1755, %v1755
    %v1820 = vmul.f32 %v1756, %v1756
    %v1821 = vmul.f32 %v1757, %v1757
    %v1822 = vmul.f32 %v1758, %v1758
    %v1823 = vmul.f32 %v1759, %v1759
    %v1824 = vmul.f32 %v1760, %v1760
    %v1825 = vmul.f32 %v1761, %v1761
    %v1826 = vmul.f32 %v1762, %v1762
    %v1827 = vmul.f32 %v1763, %v1763
    %v1828 = vmul.f32 %v1764, %v1764
    %v1829 = vmul.f32 %v1765, %v1765
    %v1830 = vmul.f32 %v1766, %v1766
    %v1831 = vmul.f32 %v1767, %v1767
    %v1832 = vmul.f32 %v1768, %v1768
    %v1833 = vmul.f32 %v1769, %v1769
    %v1834 = vmul.f32 %v1770, %v1770
    %v1835 = vmul.f32 %v1771, %v1771
    %v1836 = vmul.f32 %v1772, %v1772
    %v1837 = vmul.f32 %v1773, %v1773
    %v1838 = vmul.f32 %v1774, %v1774
    %v1839 = vmul.f32 %v1775, %v1775
    %v1840 = vsel %vm145, %v1776, 0.0
    %1841 = vadd.xlane.f32.xlu0 %v1840
    %v1842 = vpop.xlane.xlu0 %1841
    %v1843 = vsel %vm145, %v1777, 0.0
    %1844 = vadd.xlane.f32.xlu0 %v1843
    %v1845 = vpop.xlane.xlu0 %1844
    %v1846 = vsel %vm145, %v1778, 0.0
    %1847 = vadd.xlane.f32.xlu0 %v1846
    %v1848 = vpop.xlane.xlu0 %1847
    %v1849 = vsel %vm145, %v1779, 0.0
    %1850 = vadd.xlane.f32.xlu0 %v1849
    %v1851 = vpop.xlane.xlu0 %1850
    %v1852 = vsel %vm145, %v1780, 0.0
    %1853 = vadd.xlane.f32.xlu0 %v1852
    %v1854 = vpop.xlane.xlu0 %1853
    %v1855 = vsel %vm145, %v1781, 0.0
    %1856 = vadd.xlane.f32.xlu0 %v1855
    %v1857 = vpop.xlane.xlu0 %1856
    %v1858 = vsel %vm145, %v1782, 0.0
    %1859 = vadd.xlane.f32.xlu0 %v1858
    %v1860 = vpop.xlane.xlu0 %1859
    %v1861 = vsel %vm145, %v1783, 0.0
    %1862 = vadd.xlane.f32.xlu0 %v1861
    %v1863 = vpop.xlane.xlu0 %1862
    %v1864 = vsel %vm145, %v1784, 0.0
    %1865 = vadd.xlane.f32.xlu0 %v1864
    %v1866 = vpop.xlane.xlu0 %1865
    %v1867 = vsel %vm145, %v1785, 0.0
    %1868 = vadd.xlane.f32.xlu0 %v1867
    %v1869 = vpop.xlane.xlu0 %1868
    %v1870 = vsel %vm145, %v1786, 0.0
    %1871 = vadd.xlane.f32.xlu0 %v1870
    %v1872 = vpop.xlane.xlu0 %1871
    %v1873 = vsel %vm145, %v1787, 0.0
    %1874 = vadd.xlane.f32.xlu0 %v1873
    %v1875 = vpop.xlane.xlu0 %1874
    %v1876 = vsel %vm145, %v1788, 0.0
    %1877 = vadd.xlane.f32.xlu0 %v1876
    %v1878 = vpop.xlane.xlu0 %1877
    %v1879 = vsel %vm145, %v1789, 0.0
    %1880 = vadd.xlane.f32.xlu0 %v1879
    %v1881 = vpop.xlane.xlu0 %1880
    %v1882 = vsel %vm145, %v1790, 0.0
    %1883 = vadd.xlane.f32.xlu0 %v1882
    %v1884 = vpop.xlane.xlu0 %1883
    %v1885 = vsel %vm145, %v1791, 0.0
    %1886 = vadd.xlane.f32.xlu0 %v1885
    %v1887 = vpop.xlane.xlu0 %1886
    %v1888 = vsel %vm145, %v1792, 0.0
    %1889 = vadd.xlane.f32.xlu0 %v1888
    %v1890 = vpop.xlane.xlu0 %1889
    %v1891 = vsel %vm145, %v1793, 0.0
    %1892 = vadd.xlane.f32.xlu0 %v1891
    %v1893 = vpop.xlane.xlu0 %1892
    %v1894 = vsel %vm145, %v1794, 0.0
    %1895 = vadd.xlane.f32.xlu0 %v1894
    %v1896 = vpop.xlane.xlu0 %1895
    %v1897 = vsel %vm145, %v1795, 0.0
    %1898 = vadd.xlane.f32.xlu0 %v1897
    %v1899 = vpop.xlane.xlu0 %1898
    %v1900 = vsel %vm145, %v1796, 0.0
    %1901 = vadd.xlane.f32.xlu0 %v1900
    %v1902 = vpop.xlane.xlu0 %1901
    %v1903 = vsel %vm145, %v1797, 0.0
    %1904 = vadd.xlane.f32.xlu0 %v1903
    %v1905 = vpop.xlane.xlu0 %1904
    %v1906 = vsel %vm145, %v1798, 0.0
    %1907 = vadd.xlane.f32.xlu0 %v1906
    %v1908 = vpop.xlane.xlu0 %1907
    %v1909 = vsel %vm145, %v1799, 0.0
    %1910 = vadd.xlane.f32.xlu0 %v1909
    %v1911 = vpop.xlane.xlu0 %1910
    %v1912 = vsel %vm145, %v1800, 0.0
    %1913 = vadd.xlane.f32.xlu0 %v1912
    %v1914 = vpop.xlane.xlu0 %1913
    %v1915 = vsel %vm145, %v1801, 0.0
    %1916 = vadd.xlane.f32.xlu0 %v1915
    %v1917 = vpop.xlane.xlu0 %1916
    %v1918 = vsel %vm145, %v1802, 0.0
    %1919 = vadd.xlane.f32.xlu0 %v1918
    %v1920 = vpop.xlane.xlu0 %1919
    %v1921 = vsel %vm145, %v1803, 0.0
    %1922 = vadd.xlane.f32.xlu0 %v1921
    %v1923 = vpop.xlane.xlu0 %1922
    %v1924 = vsel %vm145, %v1804, 0.0
    %1925 = vadd.xlane.f32.xlu0 %v1924
    %v1926 = vpop.xlane.xlu0 %1925
    %v1927 = vsel %vm145, %v1805, 0.0
    %1928 = vadd.xlane.f32.xlu0 %v1927
    %v1929 = vpop.xlane.xlu0 %1928
    %v1930 = vsel %vm145, %v1806, 0.0
    %1931 = vadd.xlane.f32.xlu0 %v1930
    %v1932 = vpop.xlane.xlu0 %1931
    %v1933 = vsel %vm145, %v1807, 0.0
    %1934 = vadd.xlane.f32.xlu0 %v1933
    %v1935 = vpop.xlane.xlu0 %1934
    %v1936 = vsel %vm145, %v1808, 0.0
    %1937 = vadd.xlane.f32.xlu0 %v1936
    %v1938 = vpop.xlane.xlu0 %1937
    %v1939 = vsel %vm145, %v1809, 0.0
    %1940 = vadd.xlane.f32.xlu0 %v1939
    %v1941 = vpop.xlane.xlu0 %1940
    %v1942 = vsel %vm145, %v1810, 0.0
    %1943 = vadd.xlane.f32.xlu0 %v1942
    %v1944 = vpop.xlane.xlu0 %1943
    %v1945 = vsel %vm145, %v1811, 0.0
    %1946 = vadd.xlane.f32.xlu0 %v1945
    %v1947 = vpop.xlane.xlu0 %1946
    %v1948 = vsel %vm145, %v1812, 0.0
    %1949 = vadd.xlane.f32.xlu0 %v1948
    %v1950 = vpop.xlane.xlu0 %1949
    %v1951 = vsel %vm145, %v1813, 0.0
    %1952 = vadd.xlane.f32.xlu0 %v1951
    %v1953 = vpop.xlane.xlu0 %1952
    %v1954 = vsel %vm145, %v1814, 0.0
    %1955 = vadd.xlane.f32.xlu0 %v1954
    %v1956 = vpop.xlane.xlu0 %1955
    %v1957 = vsel %vm145, %v1815, 0.0
    %1958 = vadd.xlane.f32.xlu0 %v1957
    %v1959 = vpop.xlane.xlu0 %1958
    %v1960 = vsel %vm145, %v1816, 0.0
    %1961 = vadd.xlane.f32.xlu0 %v1960
    %v1962 = vpop.xlane.xlu0 %1961
    %v1963 = vsel %vm145, %v1817, 0.0
    %1964 = vadd.xlane.f32.xlu0 %v1963
    %v1965 = vpop.xlane.xlu0 %1964
    %v1966 = vsel %vm145, %v1818, 0.0
    %1967 = vadd.xlane.f32.xlu0 %v1966
    %v1968 = vpop.xlane.xlu0 %1967
    %v1969 = vsel %vm145, %v1819, 0.0
    %1970 = vadd.xlane.f32.xlu0 %v1969
    %v1971 = vpop.xlane.xlu0 %1970
    %v1972 = vsel %vm145, %v1820, 0.0
    %1973 = vadd.xlane.f32.xlu0 %v1972
    %v1974 = vpop.xlane.xlu0 %1973
    %v1975 = vsel %vm145, %v1821, 0.0
    %1976 = vadd.xlane.f32.xlu0 %v1975
    %v1977 = vpop.xlane.xlu0 %1976
    %v1978 = vsel %vm145, %v1822, 0.0
    %1979 = vadd.xlane.f32.xlu0 %v1978
    %v1980 = vpop.xlane.xlu0 %1979
    %v1981 = vsel %vm145, %v1823, 0.0
    %1982 = vadd.xlane.f32.xlu0 %v1981
    %v1983 = vpop.xlane.xlu0 %1982
    %v1984 = vsel %vm145, %v1824, 0.0
    %1985 = vadd.xlane.f32.xlu0 %v1984
    %v1986 = vpop.xlane.xlu0 %1985
    %v1987 = vsel %vm145, %v1825, 0.0
    %1988 = vadd.xlane.f32.xlu0 %v1987
    %v1989 = vpop.xlane.xlu0 %1988
    %v1990 = vsel %vm145, %v1826, 0.0
    %1991 = vadd.xlane.f32.xlu0 %v1990
    %v1992 = vpop.xlane.xlu0 %1991
    %v1993 = vsel %vm145, %v1827, 0.0
    %1994 = vadd.xlane.f32.xlu0 %v1993
    %v1995 = vpop.xlane.xlu0 %1994
    %v1996 = vsel %vm145, %v1828, 0.0
    %1997 = vadd.xlane.f32.xlu0 %v1996
    %v1998 = vpop.xlane.xlu0 %1997
    %v1999 = vsel %vm145, %v1829, 0.0
    %2000 = vadd.xlane.f32.xlu0 %v1999
    %v2001 = vpop.xlane.xlu0 %2000
    %v2002 = vsel %vm145, %v1830, 0.0
    %2003 = vadd.xlane.f32.xlu0 %v2002
    %v2004 = vpop.xlane.xlu0 %2003
    %v2005 = vsel %vm145, %v1831, 0.0
    %2006 = vadd.xlane.f32.xlu0 %v2005
    %v2007 = vpop.xlane.xlu0 %2006
    %v2008 = vsel %vm145, %v1832, 0.0
    %2009 = vadd.xlane.f32.xlu0 %v2008
    %v2010 = vpop.xlane.xlu0 %2009
    %v2011 = vsel %vm145, %v1833, 0.0
    %2012 = vadd.xlane.f32.xlu0 %v2011
    %v2013 = vpop.xlane.xlu0 %2012
    %v2014 = vsel %vm145, %v1834, 0.0
    %2015 = vadd.xlane.f32.xlu0 %v2014
    %v2016 = vpop.xlane.xlu0 %2015
    %v2017 = vsel %vm145, %v1835, 0.0
    %2018 = vadd.xlane.f32.xlu0 %v2017
    %v2019 = vpop.xlane.xlu0 %2018
    %v2020 = vsel %vm145, %v1836, 0.0
    %2021 = vadd.xlane.f32.xlu0 %v2020
    %v2022 = vpop.xlane.xlu0 %2021
    %v2023 = vsel %vm145, %v1837, 0.0
    %2024 = vadd.xlane.f32.xlu0 %v2023
    %v2025 = vpop.xlane.xlu0 %2024
    %v2026 = vsel %vm145, %v1838, 0.0
    %2027 = vadd.xlane.f32.xlu0 %v2026
    %v2028 = vpop.xlane.xlu0 %2027
    %v2029 = vsel %vm145, %v1839, 0.0
    %2030 = vadd.xlane.f32.xlu0 %v2029
    %v2031 = vpop.xlane.xlu0 %2030
    %v2096 = vlaneseq
    %v2097 = vshrl.u32 %v2096, 7
    %v2098 = vsub.s32 %v117, %v2097
    %v2099 = vrot.slane %v1842, %v2098
    %v2100 = vadd.s32 %v117, 4294967288
    %v2101 = vlaneseq
    %v2102 = vshrl.u32 %v2101, 7
    %v2103 = vsub.s32 %v2100, %v2102
    %v2104 = vrot.slane %v1845, %v2103
    %vm2105 = vcmask 130112
    %v2106 = vsel %vm2105, %v2104, %v2099
    %v2107 = vadd.s32 %v117, 4294967280
    %v2108 = vlaneseq
    %v2109 = vshrl.u32 %v2108, 7
    %v2110 = vsub.s32 %v2107, %v2109
    %v2111 = vrot.slane %v1848, %v2110
    %vm2112 = vcmask 195712
    %v2113 = vsel %vm2112, %v2111, %v2106
    %v2114 = vadd.s32 %v117, 4294967272
    %v2115 = vlaneseq
    %v2116 = vshrl.u32 %v2115, 7
    %v2117 = vsub.s32 %v2114, %v2116
    %v2118 = vrot.slane %v1851, %v2117
    %vm2119 = vcmask 261312
    %v2120 = vsel %vm2119, %v2118, %v2113
    %v2121 = vlaneseq
    %v2122 = vshrl.u32 %v2121, 7
    %v2123 = vsub.s32 %v117, %v2122
    %v2124 = vrot.slane %v1854, %v2123
    %v2125 = vlaneseq
    %v2126 = vshrl.u32 %v2125, 7
    %v2127 = vsub.s32 %v2100, %v2126
    %v2128 = vrot.slane %v1857, %v2127
    %v2129 = vsel %vm2105, %v2128, %v2124
    %v2130 = vlaneseq
    %v2131 = vshrl.u32 %v2130, 7
    %v2132 = vsub.s32 %v2107, %v2131
    %v2133 = vrot.slane %v1860, %v2132
    %v2134 = vsel %vm2112, %v2133, %v2129
    %v2135 = vlaneseq
    %v2136 = vshrl.u32 %v2135, 7
    %v2137 = vsub.s32 %v2114, %v2136
    %v2138 = vrot.slane %v1863, %v2137
    %v2139 = vsel %vm2119, %v2138, %v2134
    %v2140 = vlaneseq
    %v2141 = vshrl.u32 %v2140, 7
    %v2142 = vsub.s32 %v117, %v2141
    %v2143 = vrot.slane %v1866, %v2142
    %v2144 = vlaneseq
    %v2145 = vshrl.u32 %v2144, 7
    %v2146 = vsub.s32 %v2100, %v2145
    %v2147 = vrot.slane %v1869, %v2146
    %v2148 = vsel %vm2105, %v2147, %v2143
    %v2149 = vlaneseq
    %v2150 = vshrl.u32 %v2149, 7
    %v2151 = vsub.s32 %v2107, %v2150
    %v2152 = vrot.slane %v1872, %v2151
    %v2153 = vsel %vm2112, %v2152, %v2148
    %v2154 = vlaneseq
    %v2155 = vshrl.u32 %v2154, 7
    %v2156 = vsub.s32 %v2114, %v2155
    %v2157 = vrot.slane %v1875, %v2156
    %v2158 = vsel %vm2119, %v2157, %v2153
    %v2159 = vlaneseq
    %v2160 = vshrl.u32 %v2159, 7
    %v2161 = vsub.s32 %v117, %v2160
    %v2162 = vrot.slane %v1878, %v2161
    %v2163 = vlaneseq
    %v2164 = vshrl.u32 %v2163, 7
    %v2165 = vsub.s32 %v2100, %v2164
    %v2166 = vrot.slane %v1881, %v2165
    %v2167 = vsel %vm2105, %v2166, %v2162
    %v2168 = vlaneseq
    %v2169 = vshrl.u32 %v2168, 7
    %v2170 = vsub.s32 %v2107, %v2169
    %v2171 = vrot.slane %v1884, %v2170
    %v2172 = vsel %vm2112, %v2171, %v2167
    %v2173 = vlaneseq
    %v2174 = vshrl.u32 %v2173, 7
    %v2175 = vsub.s32 %v2114, %v2174
    %v2176 = vrot.slane %v1887, %v2175
    %v2177 = vsel %vm2119, %v2176, %v2172
    %v2178 = vlaneseq
    %v2179 = vshrl.u32 %v2178, 7
    %v2180 = vsub.s32 %v117, %v2179
    %v2181 = vrot.slane %v1890, %v2180
    %v2182 = vlaneseq
    %v2183 = vshrl.u32 %v2182, 7
    %v2184 = vsub.s32 %v2100, %v2183
    %v2185 = vrot.slane %v1893, %v2184
    %v2186 = vsel %vm2105, %v2185, %v2181
    %v2187 = vlaneseq
    %v2188 = vshrl.u32 %v2187, 7
    %v2189 = vsub.s32 %v2107, %v2188
    %v2190 = vrot.slane %v1896, %v2189
    %v2191 = vsel %vm2112, %v2190, %v2186
    %v2192 = vlaneseq
    %v2193 = vshrl.u32 %v2192, 7
    %v2194 = vsub.s32 %v2114, %v2193
    %v2195 = vrot.slane %v1899, %v2194
    %v2196 = vsel %vm2119, %v2195, %v2191
    %v2197 = vlaneseq
    %v2198 = vshrl.u32 %v2197, 7
    %v2199 = vsub.s32 %v117, %v2198
    %v2200 = vrot.slane %v1902, %v2199
    %v2201 = vlaneseq
    %v2202 = vshrl.u32 %v2201, 7
    %v2203 = vsub.s32 %v2100, %v2202
    %v2204 = vrot.slane %v1905, %v2203
    %v2205 = vsel %vm2105, %v2204, %v2200
    %v2206 = vlaneseq
    %v2207 = vshrl.u32 %v2206, 7
    %v2208 = vsub.s32 %v2107, %v2207
    %v2209 = vrot.slane %v1908, %v2208
    %v2210 = vsel %vm2112, %v2209, %v2205
    %v2211 = vlaneseq
    %v2212 = vshrl.u32 %v2211, 7
    %v2213 = vsub.s32 %v2114, %v2212
    %v2214 = vrot.slane %v1911, %v2213
    %v2215 = vsel %vm2119, %v2214, %v2210
    %v2216 = vlaneseq
    %v2217 = vshrl.u32 %v2216, 7
    %v2218 = vsub.s32 %v117, %v2217
    %v2219 = vrot.slane %v1914, %v2218
    %v2220 = vlaneseq
    %v2221 = vshrl.u32 %v2220, 7
    %v2222 = vsub.s32 %v2100, %v2221
    %v2223 = vrot.slane %v1917, %v2222
    %v2224 = vsel %vm2105, %v2223, %v2219
    %v2225 = vlaneseq
    %v2226 = vshrl.u32 %v2225, 7
    %v2227 = vsub.s32 %v2107, %v2226
    %v2228 = vrot.slane %v1920, %v2227
    %v2229 = vsel %vm2112, %v2228, %v2224
    %v2230 = vlaneseq
    %v2231 = vshrl.u32 %v2230, 7
    %v2232 = vsub.s32 %v2114, %v2231
    %v2233 = vrot.slane %v1923, %v2232
    %v2234 = vsel %vm2119, %v2233, %v2229
    %v2235 = vlaneseq
    %v2236 = vshrl.u32 %v2235, 7
    %v2237 = vsub.s32 %v117, %v2236
    %v2238 = vrot.slane %v1926, %v2237
    %v2239 = vlaneseq
    %v2240 = vshrl.u32 %v2239, 7
    %v2241 = vsub.s32 %v2100, %v2240
    %v2242 = vrot.slane %v1929, %v2241
    %v2243 = vsel %vm2105, %v2242, %v2238
    %v2244 = vlaneseq
    %v2245 = vshrl.u32 %v2244, 7
    %v2246 = vsub.s32 %v2107, %v2245
    %v2247 = vrot.slane %v1932, %v2246
    %v2248 = vsel %vm2112, %v2247, %v2243
    %v2249 = vlaneseq
    %v2250 = vshrl.u32 %v2249, 7
    %v2251 = vsub.s32 %v2114, %v2250
    %v2252 = vrot.slane %v1935, %v2251
    %v2253 = vsel %vm2119, %v2252, %v2248
    %v2254 = vlaneseq
    %v2255 = vshrl.u32 %v2254, 7
    %v2256 = vsub.s32 %v117, %v2255
    %v2257 = vrot.slane %v1938, %v2256
    %v2258 = vlaneseq
    %v2259 = vshrl.u32 %v2258, 7
    %v2260 = vsub.s32 %v2100, %v2259
    %v2261 = vrot.slane %v1941, %v2260
    %v2262 = vsel %vm2105, %v2261, %v2257
    %v2263 = vlaneseq
    %v2264 = vshrl.u32 %v2263, 7
    %v2265 = vsub.s32 %v2107, %v2264
    %v2266 = vrot.slane %v1944, %v2265
    %v2267 = vsel %vm2112, %v2266, %v2262
    %v2268 = vlaneseq
    %v2269 = vshrl.u32 %v2268, 7
    %v2270 = vsub.s32 %v2114, %v2269
    %v2271 = vrot.slane %v1947, %v2270
    %v2272 = vsel %vm2119, %v2271, %v2267
    %v2273 = vlaneseq
    %v2274 = vshrl.u32 %v2273, 7
    %v2275 = vsub.s32 %v117, %v2274
    %v2276 = vrot.slane %v1950, %v2275
    %v2277 = vlaneseq
    %v2278 = vshrl.u32 %v2277, 7
    %v2279 = vsub.s32 %v2100, %v2278
    %v2280 = vrot.slane %v1953, %v2279
    %v2281 = vsel %vm2105, %v2280, %v2276
    %v2282 = vlaneseq
    %v2283 = vshrl.u32 %v2282, 7
    %v2284 = vsub.s32 %v2107, %v2283
    %v2285 = vrot.slane %v1956, %v2284
    %v2286 = vsel %vm2112, %v2285, %v2281
    %v2287 = vlaneseq
    %v2288 = vshrl.u32 %v2287, 7
    %v2289 = vsub.s32 %v2114, %v2288
    %v2290 = vrot.slane %v1959, %v2289
    %v2291 = vsel %vm2119, %v2290, %v2286
    %v2292 = vlaneseq
    %v2293 = vshrl.u32 %v2292, 7
    %v2294 = vsub.s32 %v117, %v2293
    %v2295 = vrot.slane %v1962, %v2294
    %v2296 = vlaneseq
    %v2297 = vshrl.u32 %v2296, 7
    %v2298 = vsub.s32 %v2100, %v2297
    %v2299 = vrot.slane %v1965, %v2298
    %v2300 = vsel %vm2105, %v2299, %v2295
    %v2301 = vlaneseq
    %v2302 = vshrl.u32 %v2301, 7
    %v2303 = vsub.s32 %v2107, %v2302
    %v2304 = vrot.slane %v1968, %v2303
    %v2305 = vsel %vm2112, %v2304, %v2300
    %v2306 = vlaneseq
    %v2307 = vshrl.u32 %v2306, 7
    %v2308 = vsub.s32 %v2114, %v2307
    %v2309 = vrot.slane %v1971, %v2308
    %v2310 = vsel %vm2119, %v2309, %v2305
    %v2311 = vlaneseq
    %v2312 = vshrl.u32 %v2311, 7
    %v2313 = vsub.s32 %v117, %v2312
    %v2314 = vrot.slane %v1974, %v2313
    %v2315 = vlaneseq
    %v2316 = vshrl.u32 %v2315, 7
    %v2317 = vsub.s32 %v2100, %v2316
    %v2318 = vrot.slane %v1977, %v2317
    %v2319 = vsel %vm2105, %v2318, %v2314
    %v2320 = vlaneseq
    %v2321 = vshrl.u32 %v2320, 7
    %v2322 = vsub.s32 %v2107, %v2321
    %v2323 = vrot.slane %v1980, %v2322
    %v2324 = vsel %vm2112, %v2323, %v2319
    %v2325 = vlaneseq
    %v2326 = vshrl.u32 %v2325, 7
    %v2327 = vsub.s32 %v2114, %v2326
    %v2328 = vrot.slane %v1983, %v2327
    %v2329 = vsel %vm2119, %v2328, %v2324
    %v2330 = vlaneseq
    %v2331 = vshrl.u32 %v2330, 7
    %v2332 = vsub.s32 %v117, %v2331
    %v2333 = vrot.slane %v1986, %v2332
    %v2334 = vlaneseq
    %v2335 = vshrl.u32 %v2334, 7
    %v2336 = vsub.s32 %v2100, %v2335
    %v2337 = vrot.slane %v1989, %v2336
    %v2338 = vsel %vm2105, %v2337, %v2333
    %v2339 = vlaneseq
    %v2340 = vshrl.u32 %v2339, 7
    %v2341 = vsub.s32 %v2107, %v2340
    %v2342 = vrot.slane %v1992, %v2341
    %v2343 = vsel %vm2112, %v2342, %v2338
    %v2344 = vlaneseq
    %v2345 = vshrl.u32 %v2344, 7
    %v2346 = vsub.s32 %v2114, %v2345
    %v2347 = vrot.slane %v1995, %v2346
    %v2348 = vsel %vm2119, %v2347, %v2343
    %v2349 = vlaneseq
    %v2350 = vshrl.u32 %v2349, 7
    %v2351 = vsub.s32 %v117, %v2350
    %v2352 = vrot.slane %v1998, %v2351
    %v2353 = vlaneseq
    %v2354 = vshrl.u32 %v2353, 7
    %v2355 = vsub.s32 %v2100, %v2354
    %v2356 = vrot.slane %v2001, %v2355
    %v2357 = vsel %vm2105, %v2356, %v2352
    %v2358 = vlaneseq
    %v2359 = vshrl.u32 %v2358, 7
    %v2360 = vsub.s32 %v2107, %v2359
    %v2361 = vrot.slane %v2004, %v2360
    %v2362 = vsel %vm2112, %v2361, %v2357
    %v2363 = vlaneseq
    %v2364 = vshrl.u32 %v2363, 7
    %v2365 = vsub.s32 %v2114, %v2364
    %v2366 = vrot.slane %v2007, %v2365
    %v2367 = vsel %vm2119, %v2366, %v2362
    %v2368 = vlaneseq
    %v2369 = vshrl.u32 %v2368, 7
    %v2370 = vsub.s32 %v117, %v2369
    %v2371 = vrot.slane %v2010, %v2370
    %v2372 = vlaneseq
    %v2373 = vshrl.u32 %v2372, 7
    %v2374 = vsub.s32 %v2100, %v2373
    %v2375 = vrot.slane %v2013, %v2374
    %v2376 = vsel %vm2105, %v2375, %v2371
    %v2377 = vlaneseq
    %v2378 = vshrl.u32 %v2377, 7
    %v2379 = vsub.s32 %v2107, %v2378
    %v2380 = vrot.slane %v2016, %v2379
    %v2381 = vsel %vm2112, %v2380, %v2376
    %v2382 = vlaneseq
    %v2383 = vshrl.u32 %v2382, 7
    %v2384 = vsub.s32 %v2114, %v2383
    %v2385 = vrot.slane %v2019, %v2384
    %v2386 = vsel %vm2119, %v2385, %v2381
    %v2387 = vlaneseq
    %v2388 = vshrl.u32 %v2387, 7
    %v2389 = vsub.s32 %v117, %v2388
    %v2390 = vrot.slane %v2022, %v2389
    %v2391 = vlaneseq
    %v2392 = vshrl.u32 %v2391, 7
    %v2393 = vsub.s32 %v2100, %v2392
    %v2394 = vrot.slane %v2025, %v2393
    %v2395 = vsel %vm2105, %v2394, %v2390
    %v2396 = vlaneseq
    %v2397 = vshrl.u32 %v2396, 7
    %v2398 = vsub.s32 %v2107, %v2397
    %v2399 = vrot.slane %v2028, %v2398
    %v2400 = vsel %vm2112, %v2399, %v2395
    %v2401 = vlaneseq
    %v2402 = vshrl.u32 %v2401, 7
    %v2403 = vsub.s32 %v2114, %v2402
    %v2404 = vrot.slane %v2031, %v2403
    %v2405 = vsel %vm2119, %v2404, %v2400
    %vm2406 = vcmask 1041409
    %v2407 = vsel %vm2406, %v2139, %v2120
    %vm2408 = vcmask 1042434
    %v2409 = vsel %vm2408, %v2158, %v2407
    %vm2410 = vcmask 1043459
    %v2411 = vsel %vm2410, %v2177, %v2409
    %vm2412 = vcmask 1044484
    %v2413 = vsel %vm2412, %v2196, %v2411
    %vm2414 = vcmask 1045509
    %v2415 = vsel %vm2414, %v2215, %v2413
    %vm2416 = vcmask 1046534
    %v2417 = vsel %vm2416, %v2234, %v2415
    %vm2418 = vcmask 1047559
    %v2419 = vsel %vm2418, %v2253, %v2417
    %v2420 = vsel %vm2406, %v2291, %v2272
    %v2421 = vsel %vm2408, %v2310, %v2420
    %v2422 = vsel %vm2410, %v2329, %v2421
    %v2423 = vsel %vm2412, %v2348, %v2422
    %v2424 = vsel %vm2414, %v2367, %v2423
    %v2425 = vsel %vm2416, %v2386, %v2424
    %v2426 = vsel %vm2418, %v2405, %v2425
    %v2429 = vsel %vm145, %v2419, 0.0
    %2430 = vadd.xlane.f32.xlu0 %v2429
    %v2431 = vpop.xlane.xlu0 %2430
    %v2432 = vsel %vm145, %v2426, 0.0
    %2433 = vadd.xlane.f32.xlu0 %v2432
    %v2434 = vpop.xlane.xlu0 %2433
    %v2435 = vld [vmem:[#allocation3] sm:$0xff]
    %v2436 = vld [vmem:[#allocation3 + $0x8] sm:$0xff]
    %v2437 = vrsqrt.pop %v2431
    %v2438 = vmul.f32 %v2431, %v2437
    %vm2439 = vcmp.eq.f32.partialorder %v2431, inf
    %v2440 = vsel %vm2439, %v2431, %v2438
    %vm2441 = vcmp.eq.f32.partialorder %v2431, 0.0
    %v2442 = vand.u32 %v2431, 2147483648
    %v2443 = vsel %vm2441, %v2442, %v2440
    %v2444 = vrsqrt.pop %v2434
    %v2445 = vmul.f32 %v2434, %v2444
    %vm2446 = vcmp.eq.f32.partialorder %v2434, inf
    %v2447 = vsel %vm2446, %v2434, %v2445
    %vm2448 = vcmp.eq.f32.partialorder %v2434, 0.0
    %v2449 = vand.u32 %v2434, 2147483648
    %v2450 = vsel %vm2448, %v2449, %v2447
    %v2451 = vsel %vm114, %v2443, 0.0
    %v2452 = vsel %vm115, %v2450, 0.0
    %v2453 = vadd.f32 %v2435, %v2451
    %v2454 = vadd.f32 %v2436, %v2452
    %vm2455 = vcmask 7168
    %2456 = vst.msk [vmem:[#allocation3] sm:$0xff] %vm2455, %v2453
    %2457 = vst.msk [vmem:[#allocation3 + $0x8] sm:$0xff] %vm2455, %v2454
    // Predicated region
    $region22: #{tpu_custom_call.1} parent=1 // pred_check
      %p2458 = pneg %p29
    $region23: #{tpu_custom_call.1} parent=1 // pred_check_branch
      %2460 = sbr.rel (%p2458) target = $region25
    $region24: #{tpu_custom_call.1} parent=1 // pred_region
      %v2461 = vld [vmem:[#allocation2] sm:$0xff]
      %v2462 = vld [vmem:[#allocation2 + $0x8] sm:$0xff]
      %v2463 = vsel %vm142, %v2461, 0.0
      %v2464 = vsel %vm142, %v2462, 0.0
      %v2465 = vadd.f32 %v2463, %v2464
      %2466 = vadd.xlane.f32.xlu0 %v2465
      %v2467 = vpop.xlane.xlu0 %2466
      %v2468 = vrot.slane %v2467, 4
      %v2469 = vadd.f32 %v2467, %v2468
      %v2470 = vrot.slane %v2469, 2
      %v2471 = vadd.f32 %v2469, %v2470
      %v2472 = vrot.slane %v2471, 1
      %v2473 = vadd.f32 %v2471, %v2472
      %s2474 = vtos %v2473
      %v2475 = vld [vmem:[#allocation3] sm:$0xff]
      %v2476 = vld [vmem:[#allocation3 + $0x8] sm:$0xff]
      %v2477 = vsel %vm2455, %v2475, 0.0
      %v2478 = vsel %vm2455, %v2476, 0.0
      %v2479 = vadd.f32 %v2477, %v2478
      %2480 = vadd.xlane.f32.xlu0 %v2479
      %v2481 = vpop.xlane.xlu0 %2480
      %v2482 = vrot.slane %v2481, 4
      %v2483 = vadd.f32 %v2481, %v2482
      %v2484 = vrot.slane %v2483, 2
      %v2485 = vadd.f32 %v2483, %v2484
      %v2486 = vrot.slane %v2485, 1
      %v2487 = vadd.f32 %v2485, %v2486
      %s2488 = vtos %v2487
      %s2489 = ssub.f32 0.0, %s2474
      %s2490 = smul.f32 %s2488, 0.001
      %s2491 = sadd.f32 %s2489, %s2490
      %v2492 = vrcp.pop 10.0
      %s2493 = vtos %v2492
      %s2494 = smul.f32 %s2491, %s2493
      %v2495 = vstv %s2494
      %2496 = vst [vmem:[#allocation7] sm:$0x1] %v2495
    $region25: #{tpu_custom_call.1} parent=1 // pred_fallthru
      _
    // Predicated region
    $region26: #{tpu_custom_call.1} parent=1 // pred_check
      _
    $region27: #{tpu_custom_call.1} parent=1 // pred_check_branch
      %2498 = sbr.rel (0) target = $region29
    $region28: #{tpu_custom_call.1} parent=1 // pred_region
      %s2500 = ssub.s32 16, 16
      %2501 = vsyncadd [#allocation6], %s2500
      %s2503 = sshll.u32 [#allocation7], 4
      %s2504 = int_to_ptr.vmem [resolvable:$true] %s2503
      %2506 = dma.vmem_to_hbm [thread:$0]  %s2504, 16, %s3, [#allocation6]
    $region29: #{tpu_custom_call.1} parent=1 // pred_fallthru
      _
    // Predicated region
    $region30: #{tpu_custom_call.1} parent=1 // pred_check
      _
    $region31: #{tpu_custom_call.1} parent=1 // pred_check_branch
      %2508 = sbr.rel (0) target = $region33
    $region32: #{tpu_custom_call.1} parent=1 // pred_region
      %2509 = dma.done [#allocation6], 16
    $region33: #{tpu_custom_call.1} parent=1 // pred_fallthru
      _
    %2510 = vsyncpa [#allocation5], 1
    %2511 = vsyncpa [#allocation6], 1

</llo_original>
